<compile_context>
chip_gen: v7x
topology: tpu7x:2x2x1
jax: 0.10.0
libtpu: 0.0.40
codegen_flags: <defaults>
</compile_context>

<pallas_src>
import functools
import numpy as np
import jax
import jax.numpy as jnp
from jax.experimental import pallas as pl
from jax.experimental.pallas import tpu as pltpu


def _pool_factors(H, W):
    """Separable pooling factors Ph (Ho,H), Pw (W,Wo) such that Ph @ X @ Pw
    equals AvgPool2d(2, 2, ceil_mode=True, count_include_pad=False) of X.
    Per-edge 1/valid-count weights are baked in (entries are {0, 0.5, 1})."""
    Ho, Wo = -(-H // 2), -(-W // 2)
    Ph = np.zeros((Ho, H), np.float32)
    for i in range(Ho):
        cnt = min(2, H - 2 * i)
        Ph[i, 2 * i:2 * i + cnt] = 1.0 / cnt
    Pw = np.zeros((W, Wo), np.float32)
    for j in range(Wo):
        cnt = min(2, W - 2 * j)
        Pw[2 * j:2 * j + cnt, j] = 1.0 / cnt
    return Ph, Pw, Ho, Wo


@functools.lru_cache(maxsize=None)
def _pool_constants(H, W, dtype):
    """Device-resident pooling factors for the 3-level cascade (cached)."""
    mats, sizes = [], []
    h, w = H, W
    for _ in range(3):
        Ph, Pw, ho, wo = _pool_factors(h, w)
        # {0, 0.5, 1} are exactly representable in bf16/f16/f32 -> keep input dtype.
        mats.append((jnp.asarray(Ph, dtype=dtype), jnp.asarray(Pw, dtype=dtype)))
        sizes.append((ho, wo))
        h, w = ho, wo
    return tuple(mats), tuple(sizes)


def _avgpool_cascade_kernel(x_ref, ph1_ref, pw1_ref, ph2_ref, pw2_ref,
                            ph3_ref, pw3_ref, s1_ref, s2_ref, s3_ref):
    cdt = x_ref.dtype
    ph1, pw1 = ph1_ref[...], pw1_ref[...]
    ph2, pw2 = ph2_ref[...], pw2_ref[...]
    ph3, pw3 = ph3_ref[...], pw3_ref[...]

    def pool(x, ph, pw):
        # rows: (Ho,H)@(H,Wl) then cols: (Ho,Wl)@(Wl,Wo) -- two small MXU
        # matmuls with f32 accumulation; edge weights are baked into ph/pw.
        t = jnp.dot(ph, x, preferred_element_type=jnp.float32)
        y = jnp.dot(t.astype(cdt), pw, preferred_element_type=jnp.float32)
        return y.astype(cdt)

    # Static unroll over the images of this block (bnc is small by construction).
    for b in range(x_ref.shape[0]):
        x = x_ref[b]                       # (H, W), input dtype
        s1 = pool(x, ph1, pw1)
        s2 = pool(s1, ph2, pw2)
        s3 = pool(s2, ph3, pw3)
        s1_ref[b] = s1
        s2_ref[b] = s2
        s3_ref[b] = s3


def _choose_bnc(NC, per_image_bytes, const_bytes):
    """Images per grid step: fit double-buffered I/O + double-buffered pooling
    factors in ~40 MiB (v7x-safe), divide NC exactly, prefer an even grid."""
    budget = 40 * 1024 * 1024 - 2 * const_bytes
    cap = max(1, min(16, NC, budget // max(1, 2 * per_image_bytes)))
    divisors = [d for d in range(1, int(cap) + 1) if NC % d == 0]
    if not divisors:
        return 1
    even = [d for d in divisors if (NC // d) % 2 == 0]   # v7x: 2 TCs share grid
    pool = even if even else divisors
    return max(pool)


def avgpool_forward(s0):
    """Equivalent of AvgPool.forward: cascaded 2x2 avg-pools -> (s1, s2, s3).
    Accepts (N, C, H, W) or (B, T, C, H, W); no parameters (AvgPool has none)."""
    *lead, H, W = s0.shape
    NC = int(np.prod(lead)) if lead else 1

    mats, sizes = _pool_constants(H, W, np.dtype(s0.dtype))
    (ph1, pw1), (ph2, pw2), (ph3, pw3) = mats
    (H1, W1), (H2, W2), (H3, W3) = sizes

    x3 = s0.reshape(NC, H, W)              # contiguous reshape, no data movement

    itemsize = np.dtype(s0.dtype).itemsize
    per_image = (H * W + H1 * W1 + H2 * W2 + H3 * W3) * itemsize
    const_bytes = sum(int(np.prod(m.shape)) for pair in mats for m in pair) * itemsize
    bnc = _choose_bnc(NC, per_image, const_bytes)
    grid = (NC // bnc,)
    vmem_limit = int(min(max(2 * bnc * per_image + 2 * const_bytes + (4 << 20),
                             32 << 20), 48 << 20))

    cost = pl.CostEstimate(
        flops=2 * NC * (H1 * H * W + H1 * W * W1
                        + H2 * H1 * W1 + H2 * W1 * W2
                        + H3 * H2 * W2 + H3 * W2 * W3),
        transcendentals=0,
        bytes_accessed=NC * per_image + const_bytes)

    s1, s2, s3 = pl.pallas_call(
        _avgpool_cascade_kernel,
        out_shape=(jax.ShapeDtypeStruct((NC, H1, W1), s0.dtype),
                   jax.ShapeDtypeStruct((NC, H2, W2), s0.dtype),
                   jax.ShapeDtypeStruct((NC, H3, W3), s0.dtype)),
        grid=grid,
        in_specs=[
            pl.BlockSpec((bnc, H, W), lambda i: (i, 0, 0)),
            pl.BlockSpec((H1, H), lambda i: (0, 0)),
            pl.BlockSpec((W, W1), lambda i: (0, 0)),
            pl.BlockSpec((H2, H1), lambda i: (0, 0)),
            pl.BlockSpec((W1, W2), lambda i: (0, 0)),
            pl.BlockSpec((H3, H2), lambda i: (0, 0)),
            pl.BlockSpec((W2, W3), lambda i: (0, 0)),
        ],
        out_specs=(
            pl.BlockSpec((bnc, H1, W1), lambda i: (i, 0, 0)),
            pl.BlockSpec((bnc, H2, W2), lambda i: (i, 0, 0)),
            pl.BlockSpec((bnc, H3, W3), lambda i: (i, 0, 0)),
        ),
        compiler_params=pltpu.CompilerParams(
            dimension_semantics=("parallel",),
            vmem_limit_bytes=vmem_limit,
        ),
        cost_estimate=cost,
    )(x3, ph1, pw1, ph2, pw2, ph3, pw3)

    return (s1.reshape(*lead, H1, W1),
            s2.reshape(*lead, H2, W2),
            s3.reshape(*lead, H3, W3))


def _ref_pool_np(x):
    """Numpy reference for avg_pool2d(2,2, ceil_mode=True, count_include_pad=False)."""
    x = np.asarray(x)
    H, W = x.shape[-2:]
    Ho, Wo = -(-H // 2), -(-W // 2)
    out = np.zeros(x.shape[:-2] + (Ho, Wo), dtype=x.dtype)
    for i in range(Ho):
        for j in range(Wo):
            win = x[..., 2 * i:2 * i + 2, 2 * j:2 * j + 2]
            out[..., i, j] = win.mean(axis=(-1, -2))
    return out


if __name__ == "__main__":
    key = jax.random.PRNGKey(0)
    k1, k2, k3 = jax.random.split(key, 3)

    # 4D single-frame input (N, C, H, W)
    x4 = jax.random.normal(k1, (2, 4, 16, 16), dtype=jnp.float32)
    # 5D time-series input (B, T, C, H, W)
    x5 = jax.random.normal(k2, (2, 3, 4, 16, 16), dtype=jnp.float32)
    # odd spatial sizes exercise ceil_mode=True + count_include_pad=False edges
    x_odd = jax.random.normal(k3, (2, 4, 13, 11), dtype=jnp.float32)

    for x in (x4, x5, x_odd):
        s1, s2, s3 = avgpool_forward(x)
        jax.block_until_ready((s1, s2, s3))
        r1 = _ref_pool_np(np.asarray(x))
        r2 = _ref_pool_np(r1)
        r3 = _ref_pool_np(r2)
        np.testing.assert_allclose(np.asarray(s1), r1, rtol=1e-5, atol=1e-5)
        np.testing.assert_allclose(np.asarray(s2), r2, rtol=1e-5, atol=1e-5)
        np.testing.assert_allclose(np.asarray(s3), r3, rtol=1e-5, atol=1e-5)

    # bf16 path (review: keep the input dtype end-to-end); loose tolerance since
    # intermediates are rounded to bf16 level-by-level like the PyTorch module.
    xb = x4.astype(jnp.bfloat16)
    b1, b2, b3 = avgpool_forward(xb)
    jax.block_until_ready((b1, b2, b3))
    xb32 = np.asarray(xb).astype(np.float32)
    rb1 = _ref_pool_np(xb32)
    rb2 = _ref_pool_np(rb1)
    rb3 = _ref_pool_np(rb2)
    np.testing.assert_allclose(np.asarray(b1).astype(np.float32), rb1, rtol=2e-2, atol=2e-2)
    np.testing.assert_allclose(np.asarray(b2).astype(np.float32), rb2, rtol=2e-2, atol=2e-2)
    np.testing.assert_allclose(np.asarray(b3).astype(np.float32), rb3, rtol=2e-2, atol=2e-2)

    print("KERNEL_OK")
</pallas_src>

<mosaic_0001>
module attributes {stable_mosaic.version = 11 : i64} {
  func.func @_avgpool_cascade_kernel(%arg0: i32, %arg1: memref<4x16x16xf32, #tpu.memory_space<vmem>>, %arg2: memref<8x16xf32, #tpu.memory_space<vmem>>, %arg3: memref<16x8xf32, #tpu.memory_space<vmem>>, %arg4: memref<4x8xf32, #tpu.memory_space<vmem>>, %arg5: memref<8x4xf32, #tpu.memory_space<vmem>>, %arg6: memref<2x4xf32, #tpu.memory_space<vmem>>, %arg7: memref<4x2xf32, #tpu.memory_space<vmem>>, %arg8: memref<4x8x8xf32, #tpu.memory_space<vmem>>, %arg9: memref<4x4x4xf32, #tpu.memory_space<vmem>>, %arg10: memref<4x2x2xf32, #tpu.memory_space<vmem>>) attributes {dimension_semantics = [#tpu.dimension_semantics<parallel>], iteration_bounds = array<i64: 2>, scalar_prefetch = 0 : i64, scratch_operands = 0 : i64, tpu.core_type = #tpu.core_type<tc>, window_params = [{transform_indices = @transform_0, window_bounds = array<i64: 4, 16, 16>}, {pipeline_mode = #tpu.pipeline_mode<synchronous>, transform_indices = @transform_1, window_bounds = array<i64: 8, 16>}, {pipeline_mode = #tpu.pipeline_mode<synchronous>, transform_indices = @transform_2, window_bounds = array<i64: 16, 8>}, {pipeline_mode = #tpu.pipeline_mode<synchronous>, transform_indices = @transform_3, window_bounds = array<i64: 4, 8>}, {pipeline_mode = #tpu.pipeline_mode<synchronous>, transform_indices = @transform_4, window_bounds = array<i64: 8, 4>}, {pipeline_mode = #tpu.pipeline_mode<synchronous>, transform_indices = @transform_5, window_bounds = array<i64: 2, 4>}, {pipeline_mode = #tpu.pipeline_mode<synchronous>, transform_indices = @transform_6, window_bounds = array<i64: 4, 2>}, {transform_indices = @transform_7, window_bounds = array<i64: 4, 8, 8>}, {transform_indices = @transform_8, window_bounds = array<i64: 4, 4, 4>}, {transform_indices = @transform_9, window_bounds = array<i64: 4, 2, 2>}]} {
    %c0 = arith.constant 0 : index
    %c0_0 = arith.constant 0 : index
    %0 = vector.load %arg2[%c0, %c0_0] : memref<8x16xf32, #tpu.memory_space<vmem>>, vector<8x16xf32>
    %c0_1 = arith.constant 0 : index
    %c0_2 = arith.constant 0 : index
    %1 = vector.load %arg3[%c0_1, %c0_2] : memref<16x8xf32, #tpu.memory_space<vmem>>, vector<16x8xf32>
    %c0_3 = arith.constant 0 : index
    %c0_4 = arith.constant 0 : index
    %2 = vector.load %arg4[%c0_3, %c0_4] : memref<4x8xf32, #tpu.memory_space<vmem>>, vector<4x8xf32>
    %c0_5 = arith.constant 0 : index
    %c0_6 = arith.constant 0 : index
    %3 = vector.load %arg5[%c0_5, %c0_6] : memref<8x4xf32, #tpu.memory_space<vmem>>, vector<8x4xf32>
    %c0_7 = arith.constant 0 : index
    %c0_8 = arith.constant 0 : index
    %4 = vector.load %arg6[%c0_7, %c0_8] : memref<2x4xf32, #tpu.memory_space<vmem>>, vector<2x4xf32>
    %c0_9 = arith.constant 0 : index
    %c0_10 = arith.constant 0 : index
    %5 = vector.load %arg7[%c0_9, %c0_10] : memref<4x2xf32, #tpu.memory_space<vmem>>, vector<4x2xf32>
    %c0_11 = arith.constant 0 : index
    %c0_12 = arith.constant 0 : index
    %c0_13 = arith.constant 0 : index
    %6 = vector.load %arg1[%c0_11, %c0_12, %c0_13] : memref<4x16x16xf32, #tpu.memory_space<vmem>>, vector<1x16x16xf32>
    %7 = vector.shape_cast %6 : vector<1x16x16xf32> to vector<16x16xf32>
    %cst = arith.constant dense<0.000000e+00> : vector<8x16xf32>
    %8 = tpu.matmul %0, %7, %cst {dimension_numbers = #tpu.dot_dimension_numbers<[1], [0], [0], [1], [0, 0, 1, 1], [], []>} : vector<8x16xf32>, vector<16x16xf32>, vector<8x16xf32> -> vector<8x16xf32>
    %cst_14 = arith.constant dense<0.000000e+00> : vector<8x8xf32>
    %9 = tpu.matmul %8, %1, %cst_14 {dimension_numbers = #tpu.dot_dimension_numbers<[1], [0], [0], [1], [0, 0, 1, 1], [], []>} : vector<8x16xf32>, vector<16x8xf32>, vector<8x8xf32> -> vector<8x8xf32>
    %cst_15 = arith.constant dense<0.000000e+00> : vector<4x8xf32>
    %10 = tpu.matmul %2, %9, %cst_15 {dimension_numbers = #tpu.dot_dimension_numbers<[1], [0], [0], [1], [0, 0, 1, 1], [], []>} : vector<4x8xf32>, vector<8x8xf32>, vector<4x8xf32> -> vector<4x8xf32>
    %cst_16 = arith.constant dense<0.000000e+00> : vector<4x4xf32>
    %11 = tpu.matmul %10, %3, %cst_16 {dimension_numbers = #tpu.dot_dimension_numbers<[1], [0], [0], [1], [0, 0, 1, 1], [], []>} : vector<4x8xf32>, vector<8x4xf32>, vector<4x4xf32> -> vector<4x4xf32>
    %cst_17 = arith.constant dense<0.000000e+00> : vector<2x4xf32>
    %12 = tpu.matmul %4, %11, %cst_17 {dimension_numbers = #tpu.dot_dimension_numbers<[1], [0], [0], [1], [0, 0, 1, 1], [], []>} : vector<2x4xf32>, vector<4x4xf32>, vector<2x4xf32> -> vector<2x4xf32>
    %cst_18 = arith.constant dense<0.000000e+00> : vector<2x2xf32>
    %13 = tpu.matmul %12, %5, %cst_18 {dimension_numbers = #tpu.dot_dimension_numbers<[1], [0], [0], [1], [0, 0, 1, 1], [], []>} : vector<2x4xf32>, vector<4x2xf32>, vector<2x2xf32> -> vector<2x2xf32>
    %c0_19 = arith.constant 0 : index
    %c0_20 = arith.constant 0 : index
    %c0_21 = arith.constant 0 : index
    %14 = vector.load %arg8[%c0_19, %c0_20, %c0_21] : memref<4x8x8xf32, #tpu.memory_space<vmem>>, vector<1x8x8xf32>
    %15 = vector.shape_cast %14 : vector<1x8x8xf32> to vector<8x8xf32>
    %16 = vector.shape_cast %9 : vector<8x8xf32> to vector<1x8x8xf32>
    tpu.vector_store %arg8[%c0_19, %c0_20, %c0_21], %16 {strides = array<i32>} : memref<4x8x8xf32, #tpu.memory_space<vmem>>, vector<1x8x8xf32>,
    %c0_22 = arith.constant 0 : index
    %c0_23 = arith.constant 0 : index
    %c0_24 = arith.constant 0 : index
    %17 = vector.load %arg9[%c0_22, %c0_23, %c0_24] : memref<4x4x4xf32, #tpu.memory_space<vmem>>, vector<1x4x4xf32>
    %18 = vector.shape_cast %17 : vector<1x4x4xf32> to vector<4x4xf32>
    %19 = vector.shape_cast %11 : vector<4x4xf32> to vector<1x4x4xf32>
    tpu.vector_store %arg9[%c0_22, %c0_23, %c0_24], %19 {strides = array<i32>} : memref<4x4x4xf32, #tpu.memory_space<vmem>>, vector<1x4x4xf32>,
    %c0_25 = arith.constant 0 : index
    %c0_26 = arith.constant 0 : index
    %c0_27 = arith.constant 0 : index
    %20 = vector.load %arg10[%c0_25, %c0_26, %c0_27] : memref<4x2x2xf32, #tpu.memory_space<vmem>>, vector<1x2x2xf32>
    %21 = vector.shape_cast %20 : vector<1x2x2xf32> to vector<2x2xf32>
    %22 = vector.shape_cast %13 : vector<2x2xf32> to vector<1x2x2xf32>
    tpu.vector_store %arg10[%c0_25, %c0_26, %c0_27], %22 {strides = array<i32>} : memref<4x2x2xf32, #tpu.memory_space<vmem>>, vector<1x2x2xf32>,
    %c1 = arith.constant 1 : index
    %c0_28 = arith.constant 0 : index
    %c0_29 = arith.constant 0 : index
    %23 = vector.load %arg1[%c1, %c0_28, %c0_29] : memref<4x16x16xf32, #tpu.memory_space<vmem>>, vector<1x16x16xf32>
    %24 = vector.shape_cast %23 : vector<1x16x16xf32> to vector<16x16xf32>
    %cst_30 = arith.constant dense<0.000000e+00> : vector<8x16xf32>
    %25 = tpu.matmul %0, %24, %cst_30 {dimension_numbers = #tpu.dot_dimension_numbers<[1], [0], [0], [1], [0, 0, 1, 1], [], []>} : vector<8x16xf32>, vector<16x16xf32>, vector<8x16xf32> -> vector<8x16xf32>
    %cst_31 = arith.constant dense<0.000000e+00> : vector<8x8xf32>
    %26 = tpu.matmul %25, %1, %cst_31 {dimension_numbers = #tpu.dot_dimension_numbers<[1], [0], [0], [1], [0, 0, 1, 1], [], []>} : vector<8x16xf32>, vector<16x8xf32>, vector<8x8xf32> -> vector<8x8xf32>
    %cst_32 = arith.constant dense<0.000000e+00> : vector<4x8xf32>
    %27 = tpu.matmul %2, %26, %cst_32 {dimension_numbers = #tpu.dot_dimension_numbers<[1], [0], [0], [1], [0, 0, 1, 1], [], []>} : vector<4x8xf32>, vector<8x8xf32>, vector<4x8xf32> -> vector<4x8xf32>
    %cst_33 = arith.constant dense<0.000000e+00> : vector<4x4xf32>
    %28 = tpu.matmul %27, %3, %cst_33 {dimension_numbers = #tpu.dot_dimension_numbers<[1], [0], [0], [1], [0, 0, 1, 1], [], []>} : vector<4x8xf32>, vector<8x4xf32>, vector<4x4xf32> -> vector<4x4xf32>
    %cst_34 = arith.constant dense<0.000000e+00> : vector<2x4xf32>
    %29 = tpu.matmul %4, %28, %cst_34 {dimension_numbers = #tpu.dot_dimension_numbers<[1], [0], [0], [1], [0, 0, 1, 1], [], []>} : vector<2x4xf32>, vector<4x4xf32>, vector<2x4xf32> -> vector<2x4xf32>
    %cst_35 = arith.constant dense<0.000000e+00> : vector<2x2xf32>
    %30 = tpu.matmul %29, %5, %cst_35 {dimension_numbers = #tpu.dot_dimension_numbers<[1], [0], [0], [1], [0, 0, 1, 1], [], []>} : vector<2x4xf32>, vector<4x2xf32>, vector<2x2xf32> -> vector<2x2xf32>
    %c1_36 = arith.constant 1 : index
    %c0_37 = arith.constant 0 : index
    %c0_38 = arith.constant 0 : index
    %31 = vector.load %arg8[%c1_36, %c0_37, %c0_38] : memref<4x8x8xf32, #tpu.memory_space<vmem>>, vector<1x8x8xf32>
    %32 = vector.shape_cast %31 : vector<1x8x8xf32> to vector<8x8xf32>
    %33 = vector.shape_cast %26 : vector<8x8xf32> to vector<1x8x8xf32>
    tpu.vector_store %arg8[%c1_36, %c0_37, %c0_38], %33 {strides = array<i32>} : memref<4x8x8xf32, #tpu.memory_space<vmem>>, vector<1x8x8xf32>,
    %c1_39 = arith.constant 1 : index
    %c0_40 = arith.constant 0 : index
    %c0_41 = arith.constant 0 : index
    %34 = vector.load %arg9[%c1_39, %c0_40, %c0_41] : memref<4x4x4xf32, #tpu.memory_space<vmem>>, vector<1x4x4xf32>
    %35 = vector.shape_cast %34 : vector<1x4x4xf32> to vector<4x4xf32>
    %36 = vector.shape_cast %28 : vector<4x4xf32> to vector<1x4x4xf32>
    tpu.vector_store %arg9[%c1_39, %c0_40, %c0_41], %36 {strides = array<i32>} : memref<4x4x4xf32, #tpu.memory_space<vmem>>, vector<1x4x4xf32>,
    %c1_42 = arith.constant 1 : index
    %c0_43 = arith.constant 0 : index
    %c0_44 = arith.constant 0 : index
    %37 = vector.load %arg10[%c1_42, %c0_43, %c0_44] : memref<4x2x2xf32, #tpu.memory_space<vmem>>, vector<1x2x2xf32>
    %38 = vector.shape_cast %37 : vector<1x2x2xf32> to vector<2x2xf32>
    %39 = vector.shape_cast %30 : vector<2x2xf32> to vector<1x2x2xf32>
    tpu.vector_store %arg10[%c1_42, %c0_43, %c0_44], %39 {strides = array<i32>} : memref<4x2x2xf32, #tpu.memory_space<vmem>>, vector<1x2x2xf32>,
    %c2 = arith.constant 2 : index
    %c0_45 = arith.constant 0 : index
    %c0_46 = arith.constant 0 : index
    %40 = vector.load %arg1[%c2, %c0_45, %c0_46] : memref<4x16x16xf32, #tpu.memory_space<vmem>>, vector<1x16x16xf32>
    %41 = vector.shape_cast %40 : vector<1x16x16xf32> to vector<16x16xf32>
    %cst_47 = arith.constant dense<0.000000e+00> : vector<8x16xf32>
    %42 = tpu.matmul %0, %41, %cst_47 {dimension_numbers = #tpu.dot_dimension_numbers<[1], [0], [0], [1], [0, 0, 1, 1], [], []>} : vector<8x16xf32>, vector<16x16xf32>, vector<8x16xf32> -> vector<8x16xf32>
    %cst_48 = arith.constant dense<0.000000e+00> : vector<8x8xf32>
    %43 = tpu.matmul %42, %1, %cst_48 {dimension_numbers = #tpu.dot_dimension_numbers<[1], [0], [0], [1], [0, 0, 1, 1], [], []>} : vector<8x16xf32>, vector<16x8xf32>, vector<8x8xf32> -> vector<8x8xf32>
    %cst_49 = arith.constant dense<0.000000e+00> : vector<4x8xf32>
    %44 = tpu.matmul %2, %43, %cst_49 {dimension_numbers = #tpu.dot_dimension_numbers<[1], [0], [0], [1], [0, 0, 1, 1], [], []>} : vector<4x8xf32>, vector<8x8xf32>, vector<4x8xf32> -> vector<4x8xf32>
    %cst_50 = arith.constant dense<0.000000e+00> : vector<4x4xf32>
    %45 = tpu.matmul %44, %3, %cst_50 {dimension_numbers = #tpu.dot_dimension_numbers<[1], [0], [0], [1], [0, 0, 1, 1], [], []>} : vector<4x8xf32>, vector<8x4xf32>, vector<4x4xf32> -> vector<4x4xf32>
    %cst_51 = arith.constant dense<0.000000e+00> : vector<2x4xf32>
    %46 = tpu.matmul %4, %45, %cst_51 {dimension_numbers = #tpu.dot_dimension_numbers<[1], [0], [0], [1], [0, 0, 1, 1], [], []>} : vector<2x4xf32>, vector<4x4xf32>, vector<2x4xf32> -> vector<2x4xf32>
    %cst_52 = arith.constant dense<0.000000e+00> : vector<2x2xf32>
    %47 = tpu.matmul %46, %5, %cst_52 {dimension_numbers = #tpu.dot_dimension_numbers<[1], [0], [0], [1], [0, 0, 1, 1], [], []>} : vector<2x4xf32>, vector<4x2xf32>, vector<2x2xf32> -> vector<2x2xf32>
    %c2_53 = arith.constant 2 : index
    %c0_54 = arith.constant 0 : index
    %c0_55 = arith.constant 0 : index
    %48 = vector.load %arg8[%c2_53, %c0_54, %c0_55] : memref<4x8x8xf32, #tpu.memory_space<vmem>>, vector<1x8x8xf32>
    %49 = vector.shape_cast %48 : vector<1x8x8xf32> to vector<8x8xf32>
    %50 = vector.shape_cast %43 : vector<8x8xf32> to vector<1x8x8xf32>
    tpu.vector_store %arg8[%c2_53, %c0_54, %c0_55], %50 {strides = array<i32>} : memref<4x8x8xf32, #tpu.memory_space<vmem>>, vector<1x8x8xf32>,
    %c2_56 = arith.constant 2 : index
    %c0_57 = arith.constant 0 : index
    %c0_58 = arith.constant 0 : index
    %51 = vector.load %arg9[%c2_56, %c0_57, %c0_58] : memref<4x4x4xf32, #tpu.memory_space<vmem>>, vector<1x4x4xf32>
    %52 = vector.shape_cast %51 : vector<1x4x4xf32> to vector<4x4xf32>
    %53 = vector.shape_cast %45 : vector<4x4xf32> to vector<1x4x4xf32>
    tpu.vector_store %arg9[%c2_56, %c0_57, %c0_58], %53 {strides = array<i32>} : memref<4x4x4xf32, #tpu.memory_space<vmem>>, vector<1x4x4xf32>,
    %c2_59 = arith.constant 2 : index
    %c0_60 = arith.constant 0 : index
    %c0_61 = arith.constant 0 : index
    %54 = vector.load %arg10[%c2_59, %c0_60, %c0_61] : memref<4x2x2xf32, #tpu.memory_space<vmem>>, vector<1x2x2xf32>
    %55 = vector.shape_cast %54 : vector<1x2x2xf32> to vector<2x2xf32>
    %56 = vector.shape_cast %47 : vector<2x2xf32> to vector<1x2x2xf32>
    tpu.vector_store %arg10[%c2_59, %c0_60, %c0_61], %56 {strides = array<i32>} : memref<4x2x2xf32, #tpu.memory_space<vmem>>, vector<1x2x2xf32>,
    %c3 = arith.constant 3 : index
    %c0_62 = arith.constant 0 : index
    %c0_63 = arith.constant 0 : index
    %57 = vector.load %arg1[%c3, %c0_62, %c0_63] : memref<4x16x16xf32, #tpu.memory_space<vmem>>, vector<1x16x16xf32>
    %58 = vector.shape_cast %57 : vector<1x16x16xf32> to vector<16x16xf32>
    %cst_64 = arith.constant dense<0.000000e+00> : vector<8x16xf32>
    %59 = tpu.matmul %0, %58, %cst_64 {dimension_numbers = #tpu.dot_dimension_numbers<[1], [0], [0], [1], [0, 0, 1, 1], [], []>} : vector<8x16xf32>, vector<16x16xf32>, vector<8x16xf32> -> vector<8x16xf32>
    %cst_65 = arith.constant dense<0.000000e+00> : vector<8x8xf32>
    %60 = tpu.matmul %59, %1, %cst_65 {dimension_numbers = #tpu.dot_dimension_numbers<[1], [0], [0], [1], [0, 0, 1, 1], [], []>} : vector<8x16xf32>, vector<16x8xf32>, vector<8x8xf32> -> vector<8x8xf32>
    %cst_66 = arith.constant dense<0.000000e+00> : vector<4x8xf32>
    %61 = tpu.matmul %2, %60, %cst_66 {dimension_numbers = #tpu.dot_dimension_numbers<[1], [0], [0], [1], [0, 0, 1, 1], [], []>} : vector<4x8xf32>, vector<8x8xf32>, vector<4x8xf32> -> vector<4x8xf32>
    %cst_67 = arith.constant dense<0.000000e+00> : vector<4x4xf32>
    %62 = tpu.matmul %61, %3, %cst_67 {dimension_numbers = #tpu.dot_dimension_numbers<[1], [0], [0], [1], [0, 0, 1, 1], [], []>} : vector<4x8xf32>, vector<8x4xf32>, vector<4x4xf32> -> vector<4x4xf32>
    %cst_68 = arith.constant dense<0.000000e+00> : vector<2x4xf32>
    %63 = tpu.matmul %4, %62, %cst_68 {dimension_numbers = #tpu.dot_dimension_numbers<[1], [0], [0], [1], [0, 0, 1, 1], [], []>} : vector<2x4xf32>, vector<4x4xf32>, vector<2x4xf32> -> vector<2x4xf32>
    %cst_69 = arith.constant dense<0.000000e+00> : vector<2x2xf32>
    %64 = tpu.matmul %63, %5, %cst_69 {dimension_numbers = #tpu.dot_dimension_numbers<[1], [0], [0], [1], [0, 0, 1, 1], [], []>} : vector<2x4xf32>, vector<4x2xf32>, vector<2x2xf32> -> vector<2x2xf32>
    %c3_70 = arith.constant 3 : index
    %c0_71 = arith.constant 0 : index
    %c0_72 = arith.constant 0 : index
    %65 = vector.load %arg8[%c3_70, %c0_71, %c0_72] : memref<4x8x8xf32, #tpu.memory_space<vmem>>, vector<1x8x8xf32>
    %66 = vector.shape_cast %65 : vector<1x8x8xf32> to vector<8x8xf32>
    %67 = vector.shape_cast %60 : vector<8x8xf32> to vector<1x8x8xf32>
    tpu.vector_store %arg8[%c3_70, %c0_71, %c0_72], %67 {strides = array<i32>} : memref<4x8x8xf32, #tpu.memory_space<vmem>>, vector<1x8x8xf32>,
    %c3_73 = arith.constant 3 : index
    %c0_74 = arith.constant 0 : index
    %c0_75 = arith.constant 0 : index
    %68 = vector.load %arg9[%c3_73, %c0_74, %c0_75] : memref<4x4x4xf32, #tpu.memory_space<vmem>>, vector<1x4x4xf32>
    %69 = vector.shape_cast %68 : vector<1x4x4xf32> to vector<4x4xf32>
    %70 = vector.shape_cast %62 : vector<4x4xf32> to vector<1x4x4xf32>
    tpu.vector_store %arg9[%c3_73, %c0_74, %c0_75], %70 {strides = array<i32>} : memref<4x4x4xf32, #tpu.memory_space<vmem>>, vector<1x4x4xf32>,
    %c3_76 = arith.constant 3 : index
    %c0_77 = arith.constant 0 : index
    %c0_78 = arith.constant 0 : index
    %71 = vector.load %arg10[%c3_76, %c0_77, %c0_78] : memref<4x2x2xf32, #tpu.memory_space<vmem>>, vector<1x2x2xf32>
    %72 = vector.shape_cast %71 : vector<1x2x2xf32> to vector<2x2xf32>
    %73 = vector.shape_cast %64 : vector<2x2xf32> to vector<1x2x2xf32>
    tpu.vector_store %arg10[%c3_76, %c0_77, %c0_78], %73 {strides = array<i32>} : memref<4x2x2xf32, #tpu.memory_space<vmem>>, vector<1x2x2xf32>,
    return
  }
  func.func @transform_0(%arg0: i32) -> (i32, i32, i32) {
    %c0_i32 = arith.constant 0 : i32
    %c0_i32_0 = arith.constant 0 : i32
    %c0_i32_1 = arith.constant 0 : i32
    return %arg0, %c0_i32, %c0_i32_0 : i32, i32, i32
  }
  func.func @transform_1(%arg0: i32) -> (i32, i32) {
    %c0_i32 = arith.constant 0 : i32
    %c0_i32_0 = arith.constant 0 : i32
    %c0_i32_1 = arith.constant 0 : i32
    return %c0_i32, %c0_i32_0 : i32, i32
  }
  func.func @transform_2(%arg0: i32) -> (i32, i32) {
    %c0_i32 = arith.constant 0 : i32
    %c0_i32_0 = arith.constant 0 : i32
    %c0_i32_1 = arith.constant 0 : i32
    return %c0_i32, %c0_i32_0 : i32, i32
  }
  func.func @transform_3(%arg0: i32) -> (i32, i32) {
    %c0_i32 = arith.constant 0 : i32
    %c0_i32_0 = arith.constant 0 : i32
    %c0_i32_1 = arith.constant 0 : i32
    return %c0_i32, %c0_i32_0 : i32, i32
  }
  func.func @transform_4(%arg0: i32) -> (i32, i32) {
    %c0_i32 = arith.constant 0 : i32
    %c0_i32_0 = arith.constant 0 : i32
    %c0_i32_1 = arith.constant 0 : i32
    return %c0_i32, %c0_i32_0 : i32, i32
  }
  func.func @transform_5(%arg0: i32) -> (i32, i32) {
    %c0_i32 = arith.constant 0 : i32
    %c0_i32_0 = arith.constant 0 : i32
    %c0_i32_1 = arith.constant 0 : i32
    return %c0_i32, %c0_i32_0 : i32, i32
  }
  func.func @transform_6(%arg0: i32) -> (i32, i32) {
    %c0_i32 = arith.constant 0 : i32
    %c0_i32_0 = arith.constant 0 : i32
    %c0_i32_1 = arith.constant 0 : i32
    return %c0_i32, %c0_i32_0 : i32, i32
  }
  func.func @transform_7(%arg0: i32) -> (i32, i32, i32) {
    %c0_i32 = arith.constant 0 : i32
    %c0_i32_0 = arith.constant 0 : i32
    %c0_i32_1 = arith.constant 0 : i32
    return %arg0, %c0_i32, %c0_i32_0 : i32, i32, i32
  }
  func.func @transform_8(%arg0: i32) -> (i32, i32, i32) {
    %c0_i32 = arith.constant 0 : i32
    %c0_i32_0 = arith.constant 0 : i32
    %c0_i32_1 = arith.constant 0 : i32
    return %arg0, %c0_i32, %c0_i32_0 : i32, i32, i32
  }
  func.func @transform_9(%arg0: i32) -> (i32, i32, i32) {
    %c0_i32 = arith.constant 0 : i32
    %c0_i32_0 = arith.constant 0 : i32
    %c0_i32_1 = arith.constant 0 : i32
    return %arg0, %c0_i32, %c0_i32_0 : i32, i32, i32
  }
}

</mosaic_0001>

<llo_original>
// kernel: tpu_custom_call.1
$region0: #{tpu_custom_call.1}
  #allocation0 [shape = 'u32[]', space=smem, size = 0x4, offset = 0x4, fixed_abs, tag = 'smem constant byte address 0x4 - core index']
  #allocation1 [shape = 'u32[144,128]{1,0:T(1,128)}', space=vmem, size = 0x12000, scoped, tag = 'internal scratch']
  %s0 = inlined_call_operand.hbm [shape: f32[8,16,16], index: 0, kind: input, shape index: {}]
  %s1 = inlined_call_operand.vmem [shape: f32[8,16], index: 1, kind: input, shape index: {}]
  %s2 = inlined_call_operand.vmem [shape: f32[16,8], index: 2, kind: input, shape index: {}]
  %s3 = inlined_call_operand.vmem [shape: f32[4,8], index: 3, kind: input, shape index: {}]
  %s4 = inlined_call_operand.vmem [shape: f32[8,4], index: 4, kind: input, shape index: {}]
  %s5 = inlined_call_operand.vmem [shape: f32[2,4], index: 5, kind: input, shape index: {}]
  %s6 = inlined_call_operand.vmem [shape: f32[4,2], index: 6, kind: input, shape index: {}]
  %s7 = inlined_call_operand.hbm [shape: f32[8,8,8], index: 7, kind: output, shape index: {0}]
  %s8 = inlined_call_operand.vmem [shape: f32[8,4,4], index: 8, kind: output, shape index: {1}]
  %s9 = inlined_call_operand.vmem [shape: f32[8,2,2], index: 9, kind: output, shape index: {2}]
  %10 = xla_tuple %s7, %s8, %s9
  %s11 = sld [smem:[#allocation0]]
  $region81: #{tpu_custom_call.1} parent=0
    _
  %s13 = ssub.s32 1, %s11
  %s14 = scalar_select 0, %s13, %s11
  $region1: #{tpu_custom_call.1} parent=0
    #allocation2 [shape = 'u8[65536]{0}', space=vmem, size = 0x10000, scoped, tag = 'input window, operand 0']
    #allocation3 [shape = 's32[2]{0}', space=sflag, size = 0x8, scoped, tag = 'scoped memory for tpu_custom_call.1']
    #allocation4 [shape = 's32[2]{0}', space=sflag, size = 0x8, scoped, tag = 'scoped memory for tpu_custom_call.1']
    #allocation5 [shape = 'u8[32768]{0}', space=vmem, size = 0x8000, scoped, tag = 'output window, operand 0']
    %15 = vsyncpa [#allocation3], 0
    %s16 = scalar_lea.sflag [#allocation3], 1
    %17 = vsyncpa %s16, 0
    %18 = vsyncpa [#allocation4], 0
    %s19 = scalar_lea.sflag [#allocation4], 1
    %20 = vsyncpa %s19, 0
    loop: start=0, step=1, limit=4
    $region2: #{tpu_custom_call.1} parent=1 // loop_pre_header
      _
    $region3: #{tpu_custom_call.1} parent=1 // loop_header
      %s22 = sphi 0, %s26
      %p23 = scmp.ge.s32.totalorder %s22, 4
      %s32 = sphi 0, %s34
      %s35 = sphi 0, %s32
      %s36 = sphi 0, %s35
      %s52 = sphi 0, %s36
      %s56 = sphi 0, %s56
      %s58 = sphi 0, %s56
      %s59 = sphi 0, %s58
      %s73 = sphi 0, %s59
      %s77 = sphi 0, %s77
      %s79 = sphi 0, %s77
      %s80 = sphi 0, %s79
      %s94 = sphi 0, %s80
      %s98 = sphi 0, %s98
      %s100 = sphi 0, %s98
      %s101 = sphi 0, %s100
      %s115 = sphi 0, %s101
      %s119 = sphi 0, %s119
      %s121 = sphi 0, %s119
      %s122 = sphi 0, %s121
      %s136 = sphi 0, %s122
      %s140 = sphi 0, %s140
      %s142 = sphi 0, %s140
      %s143 = sphi 0, %s142
      %s157 = sphi 0, %s143
      %s161 = sphi 0, %s161
      %s163 = sphi 0, %s161
      %s164 = sphi 0, %s163
      %s178 = sphi 0, %s164
      %s184 = sphi 0, %s186
      %s187 = sphi 0, %s184
      %s188 = sphi 0, %s187
      %s204 = sphi 0, %s188
      %s210 = sphi 0, %s212
      %s213 = sphi 0, %s210
      %s214 = sphi 0, %s213
      %s230 = sphi 0, %s214
      %s236 = sphi 0, %s238
      %s239 = sphi 0, %s236
      %s240 = sphi 0, %s239
      %s256 = sphi 0, %s240
    $region4: #{tpu_custom_call.1} parent=1 // loop_header_branch
      %25 = sbr.rel (%p23) target = $region8
    $region5: #{tpu_custom_call.1} parent=1 // loop_body
      %s27 = ssub.s32 %s22, 1
      %s28 = ssub.s32 %s22, 2
      %s29 = sadd.s32 %s22, 1
      %s30 = ssub.s32 %s22, %s29
      %p31 = scmp.eq.s32.totalorder %s30, 0
      %s33 = sadd.s32 %s32, 1
      %s34 = scalar_select %p31, %s32, %s33
      %p37 = pneg %p31
      %p38 = scmp.eq.s32.totalorder %s22, 1
      %p39 = por %p37, %p38
      %p40 = scmp.ne.s32.totalorder %s32, %s35
      %p41 = scmp.eq.s32.totalorder %s22, 0
      %p42 = por %p40, %p41
      %p43 = scmp.ne.s32.totalorder %s32, %s35
      %p44 = scmp.eq.s32.totalorder %s27, 1
      %p45 = por %p43, %p44
      %p46 = scmp.ne.s32.totalorder %s35, %s36
      %p47 = scmp.eq.s32.totalorder %s27, 0
      %p48 = por %p46, %p47
      %p49 = scmp.ne.s32.totalorder %s35, %s36
      %p50 = scmp.eq.s32.totalorder %s28, 1
      %p51 = por %p49, %p50
      %p53 = scmp.ne.s32.totalorder %s36, %s52
      %p54 = scmp.eq.s32.totalorder %s28, 0
      %p55 = por %p53, %p54
      %s57 = sadd.s32 %s56, 1
      %p60 = scmp.eq.s32.totalorder %s22, 1
      %p61 = scmp.ne.s32.totalorder %s56, %s58
      %p62 = scmp.eq.s32.totalorder %s22, 0
      %p63 = por %p61, %p62
      %p64 = scmp.ne.s32.totalorder %s56, %s58
      %p65 = scmp.eq.s32.totalorder %s27, 1
      %p66 = por %p64, %p65
      %p67 = scmp.ne.s32.totalorder %s58, %s59
      %p68 = scmp.eq.s32.totalorder %s27, 0
      %p69 = por %p67, %p68
      %p70 = scmp.ne.s32.totalorder %s58, %s59
      %p71 = scmp.eq.s32.totalorder %s28, 1
      %p72 = por %p70, %p71
      %p74 = scmp.ne.s32.totalorder %s59, %s73
      %p75 = scmp.eq.s32.totalorder %s28, 0
      %p76 = por %p74, %p75
      %s78 = sadd.s32 %s77, 1
      %p81 = scmp.eq.s32.totalorder %s22, 1
      %p82 = scmp.ne.s32.totalorder %s77, %s79
      %p83 = scmp.eq.s32.totalorder %s22, 0
      %p84 = por %p82, %p83
      %p85 = scmp.ne.s32.totalorder %s77, %s79
      %p86 = scmp.eq.s32.totalorder %s27, 1
      %p87 = por %p85, %p86
      %p88 = scmp.ne.s32.totalorder %s79, %s80
      %p89 = scmp.eq.s32.totalorder %s27, 0
      %p90 = por %p88, %p89
      %p91 = scmp.ne.s32.totalorder %s79, %s80
      %p92 = scmp.eq.s32.totalorder %s28, 1
      %p93 = por %p91, %p92
      %p95 = scmp.ne.s32.totalorder %s80, %s94
      %p96 = scmp.eq.s32.totalorder %s28, 0
      %p97 = por %p95, %p96
      %s99 = sadd.s32 %s98, 1
      %p102 = scmp.eq.s32.totalorder %s22, 1
      %p103 = scmp.ne.s32.totalorder %s98, %s100
      %p104 = scmp.eq.s32.totalorder %s22, 0
      %p105 = por %p103, %p104
      %p106 = scmp.ne.s32.totalorder %s98, %s100
      %p107 = scmp.eq.s32.totalorder %s27, 1
      %p108 = por %p106, %p107
      %p109 = scmp.ne.s32.totalorder %s100, %s101
      %p110 = scmp.eq.s32.totalorder %s27, 0
      %p111 = por %p109, %p110
      %p112 = scmp.ne.s32.totalorder %s100, %s101
      %p113 = scmp.eq.s32.totalorder %s28, 1
      %p114 = por %p112, %p113
      %p116 = scmp.ne.s32.totalorder %s101, %s115
      %p117 = scmp.eq.s32.totalorder %s28, 0
      %p118 = por %p116, %p117
      %s120 = sadd.s32 %s119, 1
      %p123 = scmp.eq.s32.totalorder %s22, 1
      %p124 = scmp.ne.s32.totalorder %s119, %s121
      %p125 = scmp.eq.s32.totalorder %s22, 0
      %p126 = por %p124, %p125
      %p127 = scmp.ne.s32.totalorder %s119, %s121
      %p128 = scmp.eq.s32.totalorder %s27, 1
      %p129 = por %p127, %p128
      %p130 = scmp.ne.s32.totalorder %s121, %s122
      %p131 = scmp.eq.s32.totalorder %s27, 0
      %p132 = por %p130, %p131
      %p133 = scmp.ne.s32.totalorder %s121, %s122
      %p134 = scmp.eq.s32.totalorder %s28, 1
      %p135 = por %p133, %p134
      %p137 = scmp.ne.s32.totalorder %s122, %s136
      %p138 = scmp.eq.s32.totalorder %s28, 0
      %p139 = por %p137, %p138
      %s141 = sadd.s32 %s140, 1
      %p144 = scmp.eq.s32.totalorder %s22, 1
      %p145 = scmp.ne.s32.totalorder %s140, %s142
      %p146 = scmp.eq.s32.totalorder %s22, 0
      %p147 = por %p145, %p146
      %p148 = scmp.ne.s32.totalorder %s140, %s142
      %p149 = scmp.eq.s32.totalorder %s27, 1
      %p150 = por %p148, %p149
      %p151 = scmp.ne.s32.totalorder %s142, %s143
      %p152 = scmp.eq.s32.totalorder %s27, 0
      %p153 = por %p151, %p152
      %p154 = scmp.ne.s32.totalorder %s142, %s143
      %p155 = scmp.eq.s32.totalorder %s28, 1
      %p156 = por %p154, %p155
      %p158 = scmp.ne.s32.totalorder %s143, %s157
      %p159 = scmp.eq.s32.totalorder %s28, 0
      %p160 = por %p158, %p159
      %s162 = sadd.s32 %s161, 1
      %p165 = scmp.eq.s32.totalorder %s22, 1
      %p166 = scmp.ne.s32.totalorder %s161, %s163
      %p167 = scmp.eq.s32.totalorder %s22, 0
      %p168 = por %p166, %p167
      %p169 = scmp.ne.s32.totalorder %s161, %s163
      %p170 = scmp.eq.s32.totalorder %s27, 1
      %p171 = por %p169, %p170
      %p172 = scmp.ne.s32.totalorder %s163, %s164
      %p173 = scmp.eq.s32.totalorder %s27, 0
      %p174 = por %p172, %p173
      %p175 = scmp.ne.s32.totalorder %s163, %s164
      %p176 = scmp.eq.s32.totalorder %s28, 1
      %p177 = por %p175, %p176
      %p179 = scmp.ne.s32.totalorder %s164, %s178
      %p180 = scmp.eq.s32.totalorder %s28, 0
      %p181 = por %p179, %p180
      %s182 = ssub.s32 %s22, %s29
      %p183 = scmp.eq.s32.totalorder %s182, 0
      %s185 = sadd.s32 %s184, 1
      %s186 = scalar_select %p183, %s184, %s185
      %p189 = pneg %p183
      %p190 = scmp.eq.s32.totalorder %s22, 1
      %p191 = por %p189, %p190
      %p192 = scmp.ne.s32.totalorder %s184, %s187
      %p193 = scmp.eq.s32.totalorder %s22, 0
      %p194 = por %p192, %p193
      %p195 = scmp.ne.s32.totalorder %s184, %s187
      %p196 = scmp.eq.s32.totalorder %s27, 1
      %p197 = por %p195, %p196
      %p198 = scmp.ne.s32.totalorder %s187, %s188
      %p199 = scmp.eq.s32.totalorder %s27, 0
      %p200 = por %p198, %p199
      %p201 = scmp.ne.s32.totalorder %s187, %s188
      %p202 = scmp.eq.s32.totalorder %s28, 1
      %p203 = por %p201, %p202
      %p205 = scmp.ne.s32.totalorder %s188, %s204
      %p206 = scmp.eq.s32.totalorder %s28, 0
      %p207 = por %p205, %p206
      %s208 = ssub.s32 %s22, %s29
      %p209 = scmp.eq.s32.totalorder %s208, 0
      %s211 = sadd.s32 %s210, 1
      %s212 = scalar_select %p209, %s210, %s211
      %p215 = pneg %p209
      %p216 = scmp.eq.s32.totalorder %s22, 1
      %p217 = por %p215, %p216
      %p218 = scmp.ne.s32.totalorder %s210, %s213
      %p219 = scmp.eq.s32.totalorder %s22, 0
      %p220 = por %p218, %p219
      %p221 = scmp.ne.s32.totalorder %s210, %s213
      %p222 = scmp.eq.s32.totalorder %s27, 1
      %p223 = por %p221, %p222
      %p224 = scmp.ne.s32.totalorder %s213, %s214
      %p225 = scmp.eq.s32.totalorder %s27, 0
      %p226 = por %p224, %p225
      %p227 = scmp.ne.s32.totalorder %s213, %s214
      %p228 = scmp.eq.s32.totalorder %s28, 1
      %p229 = por %p227, %p228
      %p231 = scmp.ne.s32.totalorder %s214, %s230
      %p232 = scmp.eq.s32.totalorder %s28, 0
      %p233 = por %p231, %p232
      %s234 = ssub.s32 %s22, %s29
      %p235 = scmp.eq.s32.totalorder %s234, 0
      %s237 = sadd.s32 %s236, 1
      %s238 = scalar_select %p235, %s236, %s237
      %p241 = pneg %p235
      %p242 = scmp.eq.s32.totalorder %s22, 1
      %p243 = por %p241, %p242
      %p244 = scmp.ne.s32.totalorder %s236, %s239
      %p245 = scmp.eq.s32.totalorder %s22, 0
      %p246 = por %p244, %p245
      %p247 = scmp.ne.s32.totalorder %s236, %s239
      %p248 = scmp.eq.s32.totalorder %s27, 1
      %p249 = por %p247, %p248
      %p250 = scmp.ne.s32.totalorder %s239, %s240
      %p251 = scmp.eq.s32.totalorder %s27, 0
      %p252 = por %p250, %p251
      %p253 = scmp.ne.s32.totalorder %s239, %s240
      %p254 = scmp.eq.s32.totalorder %s28, 1
      %p255 = por %p253, %p254
      %p257 = scmp.ne.s32.totalorder %s240, %s256
      %p258 = scmp.eq.s32.totalorder %s28, 0
      %p259 = por %p257, %p258
      %p260 = scmp.le.s32.totalorder 1, %s22
      %p261 = scmp.lt.s32.totalorder %s22, 3
      %p262 = pnand %p260, %p261
      %p263 = pneg %p262
      // Predicated region
      $region9: #{tpu_custom_call.1} parent=5 // pred_check
        _
      $region10: #{tpu_custom_call.1} parent=5 // pred_check_branch
        %265 = sbr.rel (%p262) target = $region12
      $region11: #{tpu_custom_call.1} parent=5 // pred_region
        %s266 = ssub.s32 %s22, 1
        // Predicated region
        $region13: #{tpu_custom_call.1} parent=11 // pred_check
          %p267 = pneg %p69
        $region14: #{tpu_custom_call.1} parent=11 // pred_check_branch
          %269 = sbr.rel (%p267) target = $region16
        $region15: #{tpu_custom_call.1} parent=11 // pred_region
          _
        $region16: #{tpu_custom_call.1} parent=11 // pred_fallthru
          _
        // Predicated region
        $region17: #{tpu_custom_call.1} parent=11 // pred_check
          %p270 = pneg %p90
        $region18: #{tpu_custom_call.1} parent=11 // pred_check_branch
          %272 = sbr.rel (%p270) target = $region20
        $region19: #{tpu_custom_call.1} parent=11 // pred_region
          _
        $region20: #{tpu_custom_call.1} parent=11 // pred_fallthru
          _
        // Predicated region
        $region21: #{tpu_custom_call.1} parent=11 // pred_check
          %p273 = pneg %p111
        $region22: #{tpu_custom_call.1} parent=11 // pred_check_branch
          %275 = sbr.rel (%p273) target = $region24
        $region23: #{tpu_custom_call.1} parent=11 // pred_region
          _
        $region24: #{tpu_custom_call.1} parent=11 // pred_fallthru
          _
        // Predicated region
        $region25: #{tpu_custom_call.1} parent=11 // pred_check
          %p276 = pneg %p132
        $region26: #{tpu_custom_call.1} parent=11 // pred_check_branch
          %278 = sbr.rel (%p276) target = $region28
        $region27: #{tpu_custom_call.1} parent=11 // pred_region
          _
        $region28: #{tpu_custom_call.1} parent=11 // pred_fallthru
          _
        // Predicated region
        $region29: #{tpu_custom_call.1} parent=11 // pred_check
          %p279 = pneg %p153
        $region30: #{tpu_custom_call.1} parent=11 // pred_check_branch
          %281 = sbr.rel (%p279) target = $region32
        $region31: #{tpu_custom_call.1} parent=11 // pred_region
          _
        $region32: #{tpu_custom_call.1} parent=11 // pred_fallthru
          _
        // Predicated region
        $region33: #{tpu_custom_call.1} parent=11 // pred_check
          %p282 = pneg %p174
        $region34: #{tpu_custom_call.1} parent=11 // pred_check_branch
          %284 = sbr.rel (%p282) target = $region36
        $region35: #{tpu_custom_call.1} parent=11 // pred_region
          _
        $region36: #{tpu_custom_call.1} parent=11 // pred_fallthru
          _
      $region12: #{tpu_custom_call.1} parent=5 // pred_fallthru
        _
      %p285 = scmp.lt.s32.totalorder %s22, 2
      // Predicated region
      $region37: #{tpu_custom_call.1} parent=5 // pred_check
        %p286 = pneg %p285
      $region38: #{tpu_custom_call.1} parent=5 // pred_check_branch
        %288 = sbr.rel (%p286) target = $region40
      $region39: #{tpu_custom_call.1} parent=5 // pred_region
        // Predicated region
        $region41: #{tpu_custom_call.1} parent=39 // pred_check
          %p289 = pneg %p42
        $region42: #{tpu_custom_call.1} parent=39 // pred_check_branch
          %291 = sbr.rel (%p289) target = $region44
        $region43: #{tpu_custom_call.1} parent=39 // pred_region
          %s292 = sand.u32 %s32, 1
          %s293 = scalar_lea.sflag [#allocation3], %s292
          %s294 = sand.u32 %s32, 1
          %s295 = smul.addr %s294, 64
          %s296 = scalar_lea.vmem [#allocation2], %s295
          %s297 = smul.u32 4, %s22
          %s299 = ssub.s32 1024, 1024
          %300 = vsyncadd %s293, %s299
          %s301 = smul.addr %s297, 2
          %s302 = smul.addr %s301, 128
          %s303 = scalar_lea.hbm %s0, %s302
          %s304 = sshll.u32 %s296, 4
          %s305 = int_to_ptr.vmem [resolvable:$true] %s304
          %310 = dma.hbm_to_vmem [thread:$0]  %s303, 1024, %s305, %s293, 128, 128, 8
        $region44: #{tpu_custom_call.1} parent=39 // pred_fallthru
          _
      $region40: #{tpu_custom_call.1} parent=5 // pred_fallthru
        _
      %p311 = scmp.le.s32.totalorder 1, %s22
      %p312 = scmp.lt.s32.totalorder %s22, 3
      %p313 = pnand %p311, %p312
      %p314 = pneg %p313
      // Predicated region
      $region45: #{tpu_custom_call.1} parent=5 // pred_check
        _
      $region46: #{tpu_custom_call.1} parent=5 // pred_check_branch
        %316 = sbr.rel (%p313) target = $region48
      $region47: #{tpu_custom_call.1} parent=5 // pred_region
        %s317 = ssub.s32 %s22, 1
        %s318 = sand.u32 %s35, 1
        %s319 = scalar_lea.sflag [#allocation3], %s318
        %s320 = sand.u32 %s35, 1
        %s321 = smul.addr %s320, 64
        %s322 = scalar_lea.vmem [#allocation2], %s321
        // Predicated region
        $region49: #{tpu_custom_call.1} parent=47 // pred_check
          %p323 = pneg %p48
        $region50: #{tpu_custom_call.1} parent=47 // pred_check_branch
          %325 = sbr.rel (%p323) target = $region52
        $region51: #{tpu_custom_call.1} parent=47 // pred_region
          %326 = dma.done %s319, 1024
        $region52: #{tpu_custom_call.1} parent=47 // pred_fallthru
          _
        %s327 = sand.u32 %s35, 1
        %s328 = scalar_lea.sflag [#allocation3], %s327
        %s329 = sand.u32 %s35, 1
        %s330 = smul.addr %s329, 64
        %s331 = scalar_lea.vmem [#allocation2], %s330
        %p332 = pneg %p48
        %p333 = pneg %p45
        %p334 = pneg %p69
        %p335 = pneg %p66
        %p336 = pneg %p90
        %p337 = pneg %p87
        %p338 = pneg %p111
        %p339 = pneg %p108
        %p340 = pneg %p132
        %p341 = pneg %p129
        %p342 = pneg %p153
        %p343 = pneg %p150
        %p344 = pneg %p174
        %p345 = pneg %p171
        %p346 = pneg %p200
        %p347 = pneg %p197
        %s348 = sand.u32 %s187, 1
        %s349 = scalar_lea.sflag [#allocation4], %s348
        %s350 = sand.u32 %s187, 1
        %s351 = smul.addr %s350, 32
        %s352 = scalar_lea.vmem [#allocation5], %s351
        %p353 = pneg %p226
        %p354 = pneg %p223
        %s355 = smul.u32 4, %s27
        %p356 = scmp.lt.s32.totalorder %s355, 7
        %s357 = scalar_select %p356, %s355, 7
        %s358 = smul.addr %s357, 4
        %s359 = scalar_lea.vmem %s8, %s358
        %p360 = pneg %p252
        %p361 = pneg %p249
        %s362 = smul.u32 4, %s27
        %p363 = scmp.lt.s32.totalorder %s362, 7
        %s364 = scalar_select %p363, %s362, 7
        %s365 = smul.addr %s364, 2
        %s366 = scalar_lea.vmem %s9, %s365
        %s367 = smul.u32 4, %s27
        %s368 = smul.u32 4, %s27
        %s369 = smul.u32 4, %s27
        %p370 = scmp.lt.s32.totalorder %s369, 7
        %s371 = scalar_select %p370, %s369, 7
        %s372 = smul.addr %s371, 4
        %s373 = scalar_lea.vmem %s8, %s372
        %s374 = smul.u32 4, %s27
        %s375 = smul.u32 4, %s27
        %p376 = scmp.lt.s32.totalorder %s375, 7
        %s377 = scalar_select %p376, %s375, 7
        %s378 = smul.addr %s377, 2
        %s379 = scalar_lea.vmem %s9, %s378
        %s380 = smul.u32 4, %s27
        %v381 = vld [vmem:[%s1] sm:$0xff]
        %v382 = vld [vmem:[%s2] sm:$0xff]
        %v383 = vld [vmem:[%s2 + $0x8] sm:$0xff]
        %v384 = vld [vmem:[%s3] sm:$0xf]
        %v385 = vld [vmem:[%s4] sm:$0xff]
        %v386 = vld [vmem:[%s5] sm:$0x3]
        %v387 = vld [vmem:[%s6] sm:$0xf]
        %v388 = vld [vmem:[%s322] sm:$0xff]
        %v389 = vld [vmem:[%s322 + $0x8] sm:$0xff]
        %vm390 = vcmask 130048
        %v392 = vsel %vm390, %v381, 0
        %394 = vmatprep.subr.mxu0 0.0
        %395 = vmatpush1.msra.mxu0 %v388
        %396 = vmatprep.subr.mxu0 0.0
        %397 = vmatpush1.msra.mxu0 %v389
        %398 = vmatprep.subr.mxu0 0.0
        %399 = vmatpush1.msra.mxu0 0.0
        %400 = vmatprep.subr.mxu0 0.0
        %401 = vmatpush1.msra.mxu0 0.0
        %402 = vmatprep.subr.mxu0 0.0
        %403 = vmatpush1.msra.mxu0 0.0
        %404 = vmatprep.subr.mxu0 0.0
        %405 = vmatpush1.msra.mxu0 0.0
        %406 = vmatprep.subr.mxu0 0.0
        %407 = vmatpush1.msra.mxu0 0.0
        %408 = vmatprep.subr.mxu0 0.0
        %409 = vmatpush1.msra.mxu0 0.0
        %410 = vmatprep.subr.mxu0 0.0
        %411 = vmatpush1.msra.mxu0 0.0
        %412 = vmatprep.subr.mxu0 0.0
        %413 = vmatpush1.msra.mxu0 0.0
        %414 = vmatprep.subr.mxu0 0.0
        %415 = vmatpush1.msra.mxu0 0.0
        %416 = vmatprep.subr.mxu0 0.0
        %417 = vmatpush1.msra.mxu0 0.0
        %418 = vmatprep.subr.mxu0 0.0
        %419 = vmatpush1.msra.mxu0 0.0
        %420 = vmatprep.subr.mxu0 0.0
        %421 = vmatpush1.msra.mxu0 0.0
        %422 = vmatprep.subr.mxu0 0.0
        %423 = vmatpush1.msra.mxu0 0.0
        %424 = vmatprep.subr.mxu0 0.0
        %425 = vmatpush1.msra.mxu0 0.0
        %426 = vmatprep.subr.mxu0 0.0
        %427 = vmatpush1.msra.mxu0 0.0
        %428 = vmatprep.subr.mxu0 0.0
        %429 = vmatpush1.msra.mxu0 0.0
        %430 = vmatprep.subr.mxu0 0.0
        %431 = vmatpush1.msra.mxu0 0.0
        %432 = vmatprep.subr.mxu0 0.0
        %433 = vmatpush1.msra.mxu0 0.0
        %434 = vmatprep.subr.mxu0 0.0
        %435 = vmatpush1.msra.mxu0 0.0
        %436 = vmatprep.subr.mxu0 0.0
        %437 = vmatpush1.msra.mxu0 0.0
        %438 = vmatprep.subr.mxu0 0.0
        %439 = vmatpush1.msra.mxu0 0.0
        %440 = vmatprep.subr.mxu0 0.0
        %441 = vmatpush1.msra.mxu0 0.0
        %442 = vmatprep.subr.mxu0 0.0
        %443 = vmatpush1.msra.mxu0 0.0
        %444 = vmatprep.subr.mxu0 0.0
        %445 = vmatpush1.msra.mxu0 0.0
        %446 = vmatprep.subr.mxu0 0.0
        %447 = vmatpush1.msra.mxu0 0.0
        %448 = vmatprep.subr.mxu0 0.0
        %449 = vmatpush1.msra.mxu0 0.0
        %450 = vmatprep.subr.mxu0 0.0
        %451 = vmatpush1.msra.mxu0 0.0
        %452 = vmatprep.subr.mxu0 0.0
        %453 = vmatpush1.msra.mxu0 0.0
        %454 = vmatprep.subr.mxu0 0.0
        %455 = vmatpush1.msra.mxu0 0.0
        %456 = vmatprep.subr.mxu0 0.0
        %457 = vmatpush1.msra.mxu0 0.0
        %458 = vmatprep.mubr.f32.mxu0 0.0
        %459 = vmatmul.mubr.f32.gmra.mrb[0].mxu0 %v392
        %v460 = vpop.f32.mrb[0].mxu0
        %v461 = vadd.f32 0.0, %v460
        %v462 = vpop.f32.mrb[0].mxu0
        %463 = vdwg.mxu0
        %v465 = vsel %vm390, %v461, 0
        %467 = vmatprep.subr.mxu0 0.0
        %468 = vmatpush1.msra.mxu0 %v382
        %469 = vmatprep.subr.mxu0 0.0
        %470 = vmatpush1.msra.mxu0 %v383
        %471 = vmatprep.subr.mxu0 0.0
        %472 = vmatpush1.msra.mxu0 0.0
        %473 = vmatprep.subr.mxu0 0.0
        %474 = vmatpush1.msra.mxu0 0.0
        %475 = vmatprep.subr.mxu0 0.0
        %476 = vmatpush1.msra.mxu0 0.0
        %477 = vmatprep.subr.mxu0 0.0
        %478 = vmatpush1.msra.mxu0 0.0
        %479 = vmatprep.subr.mxu0 0.0
        %480 = vmatpush1.msra.mxu0 0.0
        %481 = vmatprep.subr.mxu0 0.0
        %482 = vmatpush1.msra.mxu0 0.0
        %483 = vmatprep.subr.mxu0 0.0
        %484 = vmatpush1.msra.mxu0 0.0
        %485 = vmatprep.subr.mxu0 0.0
        %486 = vmatpush1.msra.mxu0 0.0
        %487 = vmatprep.subr.mxu0 0.0
        %488 = vmatpush1.msra.mxu0 0.0
        %489 = vmatprep.subr.mxu0 0.0
        %490 = vmatpush1.msra.mxu0 0.0
        %491 = vmatprep.subr.mxu0 0.0
        %492 = vmatpush1.msra.mxu0 0.0
        %493 = vmatprep.subr.mxu0 0.0
        %494 = vmatpush1.msra.mxu0 0.0
        %495 = vmatprep.subr.mxu0 0.0
        %496 = vmatpush1.msra.mxu0 0.0
        %497 = vmatprep.subr.mxu0 0.0
        %498 = vmatpush1.msra.mxu0 0.0
        %499 = vmatprep.subr.mxu0 0.0
        %500 = vmatpush1.msra.mxu0 0.0
        %501 = vmatprep.subr.mxu0 0.0
        %502 = vmatpush1.msra.mxu0 0.0
        %503 = vmatprep.subr.mxu0 0.0
        %504 = vmatpush1.msra.mxu0 0.0
        %505 = vmatprep.subr.mxu0 0.0
        %506 = vmatpush1.msra.mxu0 0.0
        %507 = vmatprep.subr.mxu0 0.0
        %508 = vmatpush1.msra.mxu0 0.0
        %509 = vmatprep.subr.mxu0 0.0
        %510 = vmatpush1.msra.mxu0 0.0
        %511 = vmatprep.subr.mxu0 0.0
        %512 = vmatpush1.msra.mxu0 0.0
        %513 = vmatprep.subr.mxu0 0.0
        %514 = vmatpush1.msra.mxu0 0.0
        %515 = vmatprep.subr.mxu0 0.0
        %516 = vmatpush1.msra.mxu0 0.0
        %517 = vmatprep.subr.mxu0 0.0
        %518 = vmatpush1.msra.mxu0 0.0
        %519 = vmatprep.subr.mxu0 0.0
        %520 = vmatpush1.msra.mxu0 0.0
        %521 = vmatprep.subr.mxu0 0.0
        %522 = vmatpush1.msra.mxu0 0.0
        %523 = vmatprep.subr.mxu0 0.0
        %524 = vmatpush1.msra.mxu0 0.0
        %525 = vmatprep.subr.mxu0 0.0
        %526 = vmatpush1.msra.mxu0 0.0
        %527 = vmatprep.subr.mxu0 0.0
        %528 = vmatpush1.msra.mxu0 0.0
        %529 = vmatprep.subr.mxu0 0.0
        %530 = vmatpush1.msra.mxu0 0.0
        %531 = vmatprep.mubr.f32.mxu0 0.0
        %532 = vmatmul.mubr.f32.gmra.mrb[0].mxu0 %v465
        %v533 = vpop.f32.mrb[0].mxu0
        %v534 = vadd.f32 0.0, %v533
        %v535 = vpop.f32.mrb[0].mxu0
        %536 = vdwg.mxu0
        %vm537 = vcmask 64512
        %v539 = vsel %vm537, %v384, 0
        %541 = vmatprep.subr.mxu0 0.0
        %542 = vmatpush1.msra.mxu0 %v534
        %543 = vmatprep.subr.mxu0 0.0
        %544 = vmatpush1.msra.mxu0 0.0
        %545 = vmatprep.subr.mxu0 0.0
        %546 = vmatpush1.msra.mxu0 0.0
        %547 = vmatprep.subr.mxu0 0.0
        %548 = vmatpush1.msra.mxu0 0.0
        %549 = vmatprep.subr.mxu0 0.0
        %550 = vmatpush1.msra.mxu0 0.0
        %551 = vmatprep.subr.mxu0 0.0
        %552 = vmatpush1.msra.mxu0 0.0
        %553 = vmatprep.subr.mxu0 0.0
        %554 = vmatpush1.msra.mxu0 0.0
        %555 = vmatprep.subr.mxu0 0.0
        %556 = vmatpush1.msra.mxu0 0.0
        %557 = vmatprep.subr.mxu0 0.0
        %558 = vmatpush1.msra.mxu0 0.0
        %559 = vmatprep.subr.mxu0 0.0
        %560 = vmatpush1.msra.mxu0 0.0
        %561 = vmatprep.subr.mxu0 0.0
        %562 = vmatpush1.msra.mxu0 0.0
        %563 = vmatprep.subr.mxu0 0.0
        %564 = vmatpush1.msra.mxu0 0.0
        %565 = vmatprep.subr.mxu0 0.0
        %566 = vmatpush1.msra.mxu0 0.0
        %567 = vmatprep.subr.mxu0 0.0
        %568 = vmatpush1.msra.mxu0 0.0
        %569 = vmatprep.subr.mxu0 0.0
        %570 = vmatpush1.msra.mxu0 0.0
        %571 = vmatprep.subr.mxu0 0.0
        %572 = vmatpush1.msra.mxu0 0.0
        %573 = vmatprep.subr.mxu0 0.0
        %574 = vmatpush1.msra.mxu0 0.0
        %575 = vmatprep.subr.mxu0 0.0
        %576 = vmatpush1.msra.mxu0 0.0
        %577 = vmatprep.subr.mxu0 0.0
        %578 = vmatpush1.msra.mxu0 0.0
        %579 = vmatprep.subr.mxu0 0.0
        %580 = vmatpush1.msra.mxu0 0.0
        %581 = vmatprep.subr.mxu0 0.0
        %582 = vmatpush1.msra.mxu0 0.0
        %583 = vmatprep.subr.mxu0 0.0
        %584 = vmatpush1.msra.mxu0 0.0
        %585 = vmatprep.subr.mxu0 0.0
        %586 = vmatpush1.msra.mxu0 0.0
        %587 = vmatprep.subr.mxu0 0.0
        %588 = vmatpush1.msra.mxu0 0.0
        %589 = vmatprep.subr.mxu0 0.0
        %590 = vmatpush1.msra.mxu0 0.0
        %591 = vmatprep.subr.mxu0 0.0
        %592 = vmatpush1.msra.mxu0 0.0
        %593 = vmatprep.subr.mxu0 0.0
        %594 = vmatpush1.msra.mxu0 0.0
        %595 = vmatprep.subr.mxu0 0.0
        %596 = vmatpush1.msra.mxu0 0.0
        %597 = vmatprep.subr.mxu0 0.0
        %598 = vmatpush1.msra.mxu0 0.0
        %599 = vmatprep.subr.mxu0 0.0
        %600 = vmatpush1.msra.mxu0 0.0
        %601 = vmatprep.subr.mxu0 0.0
        %602 = vmatpush1.msra.mxu0 0.0
        %603 = vmatprep.subr.mxu0 0.0
        %604 = vmatpush1.msra.mxu0 0.0
        %605 = vmatprep.mubr.f32.mxu0 0.0
        %606 = vmatmul.mubr.f32.gmra.mrb[0].mxu0 %v539
        %v607 = vpop.f32.mrb[0].mxu0
        %v608 = vadd.f32 0.0, %v607
        %v609 = vpop.f32.mrb[0].mxu0
        %610 = vdwg.mxu0
        %v612 = vsel %vm537, %v608, 0
        %614 = vmatprep.subr.mxu0 0.0
        %615 = vmatpush1.msra.mxu0 %v385
        %616 = vmatprep.subr.mxu0 0.0
        %617 = vmatpush1.msra.mxu0 0.0
        %618 = vmatprep.subr.mxu0 0.0
        %619 = vmatpush1.msra.mxu0 0.0
        %620 = vmatprep.subr.mxu0 0.0
        %621 = vmatpush1.msra.mxu0 0.0
        %622 = vmatprep.subr.mxu0 0.0
        %623 = vmatpush1.msra.mxu0 0.0
        %624 = vmatprep.subr.mxu0 0.0
        %625 = vmatpush1.msra.mxu0 0.0
        %626 = vmatprep.subr.mxu0 0.0
        %627 = vmatpush1.msra.mxu0 0.0
        %628 = vmatprep.subr.mxu0 0.0
        %629 = vmatpush1.msra.mxu0 0.0
        %630 = vmatprep.subr.mxu0 0.0
        %631 = vmatpush1.msra.mxu0 0.0
        %632 = vmatprep.subr.mxu0 0.0
        %633 = vmatpush1.msra.mxu0 0.0
        %634 = vmatprep.subr.mxu0 0.0
        %635 = vmatpush1.msra.mxu0 0.0
        %636 = vmatprep.subr.mxu0 0.0
        %637 = vmatpush1.msra.mxu0 0.0
        %638 = vmatprep.subr.mxu0 0.0
        %639 = vmatpush1.msra.mxu0 0.0
        %640 = vmatprep.subr.mxu0 0.0
        %641 = vmatpush1.msra.mxu0 0.0
        %642 = vmatprep.subr.mxu0 0.0
        %643 = vmatpush1.msra.mxu0 0.0
        %644 = vmatprep.subr.mxu0 0.0
        %645 = vmatpush1.msra.mxu0 0.0
        %646 = vmatprep.subr.mxu0 0.0
        %647 = vmatpush1.msra.mxu0 0.0
        %648 = vmatprep.subr.mxu0 0.0
        %649 = vmatpush1.msra.mxu0 0.0
        %650 = vmatprep.subr.mxu0 0.0
        %651 = vmatpush1.msra.mxu0 0.0
        %652 = vmatprep.subr.mxu0 0.0
        %653 = vmatpush1.msra.mxu0 0.0
        %654 = vmatprep.subr.mxu0 0.0
        %655 = vmatpush1.msra.mxu0 0.0
        %656 = vmatprep.subr.mxu0 0.0
        %657 = vmatpush1.msra.mxu0 0.0
        %658 = vmatprep.subr.mxu0 0.0
        %659 = vmatpush1.msra.mxu0 0.0
        %660 = vmatprep.subr.mxu0 0.0
        %661 = vmatpush1.msra.mxu0 0.0
        %662 = vmatprep.subr.mxu0 0.0
        %663 = vmatpush1.msra.mxu0 0.0
        %664 = vmatprep.subr.mxu0 0.0
        %665 = vmatpush1.msra.mxu0 0.0
        %666 = vmatprep.subr.mxu0 0.0
        %667 = vmatpush1.msra.mxu0 0.0
        %668 = vmatprep.subr.mxu0 0.0
        %669 = vmatpush1.msra.mxu0 0.0
        %670 = vmatprep.subr.mxu0 0.0
        %671 = vmatpush1.msra.mxu0 0.0
        %672 = vmatprep.subr.mxu0 0.0
        %673 = vmatpush1.msra.mxu0 0.0
        %674 = vmatprep.subr.mxu0 0.0
        %675 = vmatpush1.msra.mxu0 0.0
        %676 = vmatprep.subr.mxu0 0.0
        %677 = vmatpush1.msra.mxu0 0.0
        %678 = vmatprep.mubr.f32.mxu0 0.0
        %679 = vmatmul.mubr.f32.gmra.mrb[0].mxu0 %v612
        %v680 = vpop.f32.mrb[0].mxu0
        %v681 = vadd.f32 0.0, %v680
        %v682 = vpop.f32.mrb[0].mxu0
        %683 = vdwg.mxu0
        %vm684 = vcmask 31744
        %v686 = vsel %vm684, %v386, 0
        %vm688 = vcmask 1043456
        %v690 = vsel %vm688, %v681, 0
        %692 = vmatprep.subr.mxu0 0.0
        %693 = vmatpush1.msra.mxu0 %v690
        %694 = vmatprep.subr.mxu0 0.0
        %695 = vmatpush1.msra.mxu0 0.0
        %696 = vmatprep.subr.mxu0 0.0
        %697 = vmatpush1.msra.mxu0 0.0
        %698 = vmatprep.subr.mxu0 0.0
        %699 = vmatpush1.msra.mxu0 0.0
        %700 = vmatprep.subr.mxu0 0.0
        %701 = vmatpush1.msra.mxu0 0.0
        %702 = vmatprep.subr.mxu0 0.0
        %703 = vmatpush1.msra.mxu0 0.0
        %704 = vmatprep.subr.mxu0 0.0
        %705 = vmatpush1.msra.mxu0 0.0
        %706 = vmatprep.subr.mxu0 0.0
        %707 = vmatpush1.msra.mxu0 0.0
        %708 = vmatprep.subr.mxu0 0.0
        %709 = vmatpush1.msra.mxu0 0.0
        %710 = vmatprep.subr.mxu0 0.0
        %711 = vmatpush1.msra.mxu0 0.0
        %712 = vmatprep.subr.mxu0 0.0
        %713 = vmatpush1.msra.mxu0 0.0
        %714 = vmatprep.subr.mxu0 0.0
        %715 = vmatpush1.msra.mxu0 0.0
        %716 = vmatprep.subr.mxu0 0.0
        %717 = vmatpush1.msra.mxu0 0.0
        %718 = vmatprep.subr.mxu0 0.0
        %719 = vmatpush1.msra.mxu0 0.0
        %720 = vmatprep.subr.mxu0 0.0
        %721 = vmatpush1.msra.mxu0 0.0
        %722 = vmatprep.subr.mxu0 0.0
        %723 = vmatpush1.msra.mxu0 0.0
        %724 = vmatprep.subr.mxu0 0.0
        %725 = vmatpush1.msra.mxu0 0.0
        %726 = vmatprep.subr.mxu0 0.0
        %727 = vmatpush1.msra.mxu0 0.0
        %728 = vmatprep.subr.mxu0 0.0
        %729 = vmatpush1.msra.mxu0 0.0
        %730 = vmatprep.subr.mxu0 0.0
        %731 = vmatpush1.msra.mxu0 0.0
        %732 = vmatprep.subr.mxu0 0.0
        %733 = vmatpush1.msra.mxu0 0.0
        %734 = vmatprep.subr.mxu0 0.0
        %735 = vmatpush1.msra.mxu0 0.0
        %736 = vmatprep.subr.mxu0 0.0
        %737 = vmatpush1.msra.mxu0 0.0
        %738 = vmatprep.subr.mxu0 0.0
        %739 = vmatpush1.msra.mxu0 0.0
        %740 = vmatprep.subr.mxu0 0.0
        %741 = vmatpush1.msra.mxu0 0.0
        %742 = vmatprep.subr.mxu0 0.0
        %743 = vmatpush1.msra.mxu0 0.0
        %744 = vmatprep.subr.mxu0 0.0
        %745 = vmatpush1.msra.mxu0 0.0
        %746 = vmatprep.subr.mxu0 0.0
        %747 = vmatpush1.msra.mxu0 0.0
        %748 = vmatprep.subr.mxu0 0.0
        %749 = vmatpush1.msra.mxu0 0.0
        %750 = vmatprep.subr.mxu0 0.0
        %751 = vmatpush1.msra.mxu0 0.0
        %752 = vmatprep.subr.mxu0 0.0
        %753 = vmatpush1.msra.mxu0 0.0
        %754 = vmatprep.subr.mxu0 0.0
        %755 = vmatpush1.msra.mxu0 0.0
        %756 = vmatprep.mubr.f32.mxu0 0.0
        %757 = vmatmul.mubr.f32.gmra.mrb[0].mxu0 %v686
        %v758 = vpop.f32.mrb[0].mxu0
        %v759 = vadd.f32 0.0, %v758
        %v760 = vpop.f32.mrb[0].mxu0
        %761 = vdwg.mxu0
        %v763 = vsel %vm684, %v759, 0
        %v766 = vsel %vm688, %v387, 0
        %768 = vmatprep.subr.mxu0 0.0
        %769 = vmatpush1.msra.mxu0 %v766
        %770 = vmatprep.subr.mxu0 0.0
        %771 = vmatpush1.msra.mxu0 0.0
        %772 = vmatprep.subr.mxu0 0.0
        %773 = vmatpush1.msra.mxu0 0.0
        %774 = vmatprep.subr.mxu0 0.0
        %775 = vmatpush1.msra.mxu0 0.0
        %776 = vmatprep.subr.mxu0 0.0
        %777 = vmatpush1.msra.mxu0 0.0
        %778 = vmatprep.subr.mxu0 0.0
        %779 = vmatpush1.msra.mxu0 0.0
        %780 = vmatprep.subr.mxu0 0.0
        %781 = vmatpush1.msra.mxu0 0.0
        %782 = vmatprep.subr.mxu0 0.0
        %783 = vmatpush1.msra.mxu0 0.0
        %784 = vmatprep.subr.mxu0 0.0
        %785 = vmatpush1.msra.mxu0 0.0
        %786 = vmatprep.subr.mxu0 0.0
        %787 = vmatpush1.msra.mxu0 0.0
        %788 = vmatprep.subr.mxu0 0.0
        %789 = vmatpush1.msra.mxu0 0.0
        %790 = vmatprep.subr.mxu0 0.0
        %791 = vmatpush1.msra.mxu0 0.0
        %792 = vmatprep.subr.mxu0 0.0
        %793 = vmatpush1.msra.mxu0 0.0
        %794 = vmatprep.subr.mxu0 0.0
        %795 = vmatpush1.msra.mxu0 0.0
        %796 = vmatprep.subr.mxu0 0.0
        %797 = vmatpush1.msra.mxu0 0.0
        %798 = vmatprep.subr.mxu0 0.0
        %799 = vmatpush1.msra.mxu0 0.0
        %800 = vmatprep.subr.mxu0 0.0
        %801 = vmatpush1.msra.mxu0 0.0
        %802 = vmatprep.subr.mxu0 0.0
        %803 = vmatpush1.msra.mxu0 0.0
        %804 = vmatprep.subr.mxu0 0.0
        %805 = vmatpush1.msra.mxu0 0.0
        %806 = vmatprep.subr.mxu0 0.0
        %807 = vmatpush1.msra.mxu0 0.0
        %808 = vmatprep.subr.mxu0 0.0
        %809 = vmatpush1.msra.mxu0 0.0
        %810 = vmatprep.subr.mxu0 0.0
        %811 = vmatpush1.msra.mxu0 0.0
        %812 = vmatprep.subr.mxu0 0.0
        %813 = vmatpush1.msra.mxu0 0.0
        %814 = vmatprep.subr.mxu0 0.0
        %815 = vmatpush1.msra.mxu0 0.0
        %816 = vmatprep.subr.mxu0 0.0
        %817 = vmatpush1.msra.mxu0 0.0
        %818 = vmatprep.subr.mxu0 0.0
        %819 = vmatpush1.msra.mxu0 0.0
        %820 = vmatprep.subr.mxu0 0.0
        %821 = vmatpush1.msra.mxu0 0.0
        %822 = vmatprep.subr.mxu0 0.0
        %823 = vmatpush1.msra.mxu0 0.0
        %824 = vmatprep.subr.mxu0 0.0
        %825 = vmatpush1.msra.mxu0 0.0
        %826 = vmatprep.subr.mxu0 0.0
        %827 = vmatpush1.msra.mxu0 0.0
        %828 = vmatprep.subr.mxu0 0.0
        %829 = vmatpush1.msra.mxu0 0.0
        %830 = vmatprep.subr.mxu0 0.0
        %831 = vmatpush1.msra.mxu0 0.0
        %832 = vmatprep.mubr.f32.mxu0 0.0
        %833 = vmatmul.mubr.f32.gmra.mrb[0].mxu0 %v763
        %v834 = vpop.f32.mrb[0].mxu0
        %v835 = vadd.f32 0.0, %v834
        %v836 = vpop.f32.mrb[0].mxu0
        %837 = vdwg.mxu0
        %838 = vst.msk [vmem:[%s352] sm:$0xff] %vm537, %v534
        %vm839 = vcmask 27648
        %840 = vst.msk [vmem:[%s373] sm:$0xf] %vm839, %v681
        %vm841 = vcmask 9216
        %842 = vst.msk [vmem:[%s379] sm:$0x3] %vm841, %v835
        %s843 = scalar_lea.vmem %s322, 16 [#allocation2]
        %v844 = vld [vmem:[%s843] sm:$0xff]
        %v845 = vld [vmem:[%s843 + $0x8] sm:$0xff]
        %846 = vmatprep.subr.mxu0 0.0
        %847 = vmatpush1.msra.mxu0 %v844
        %848 = vmatprep.subr.mxu0 0.0
        %849 = vmatpush1.msra.mxu0 %v845
        %850 = vmatprep.subr.mxu0 0.0
        %851 = vmatpush1.msra.mxu0 0.0
        %852 = vmatprep.subr.mxu0 0.0
        %853 = vmatpush1.msra.mxu0 0.0
        %854 = vmatprep.subr.mxu0 0.0
        %855 = vmatpush1.msra.mxu0 0.0
        %856 = vmatprep.subr.mxu0 0.0
        %857 = vmatpush1.msra.mxu0 0.0
        %858 = vmatprep.subr.mxu0 0.0
        %859 = vmatpush1.msra.mxu0 0.0
        %860 = vmatprep.subr.mxu0 0.0
        %861 = vmatpush1.msra.mxu0 0.0
        %862 = vmatprep.subr.mxu0 0.0
        %863 = vmatpush1.msra.mxu0 0.0
        %864 = vmatprep.subr.mxu0 0.0
        %865 = vmatpush1.msra.mxu0 0.0
        %866 = vmatprep.subr.mxu0 0.0
        %867 = vmatpush1.msra.mxu0 0.0
        %868 = vmatprep.subr.mxu0 0.0
        %869 = vmatpush1.msra.mxu0 0.0
        %870 = vmatprep.subr.mxu0 0.0
        %871 = vmatpush1.msra.mxu0 0.0
        %872 = vmatprep.subr.mxu0 0.0
        %873 = vmatpush1.msra.mxu0 0.0
        %874 = vmatprep.subr.mxu0 0.0
        %875 = vmatpush1.msra.mxu0 0.0
        %876 = vmatprep.subr.mxu0 0.0
        %877 = vmatpush1.msra.mxu0 0.0
        %878 = vmatprep.subr.mxu0 0.0
        %879 = vmatpush1.msra.mxu0 0.0
        %880 = vmatprep.subr.mxu0 0.0
        %881 = vmatpush1.msra.mxu0 0.0
        %882 = vmatprep.subr.mxu0 0.0
        %883 = vmatpush1.msra.mxu0 0.0
        %884 = vmatprep.subr.mxu0 0.0
        %885 = vmatpush1.msra.mxu0 0.0
        %886 = vmatprep.subr.mxu0 0.0
        %887 = vmatpush1.msra.mxu0 0.0
        %888 = vmatprep.subr.mxu0 0.0
        %889 = vmatpush1.msra.mxu0 0.0
        %890 = vmatprep.subr.mxu0 0.0
        %891 = vmatpush1.msra.mxu0 0.0
        %892 = vmatprep.subr.mxu0 0.0
        %893 = vmatpush1.msra.mxu0 0.0
        %894 = vmatprep.subr.mxu0 0.0
        %895 = vmatpush1.msra.mxu0 0.0
        %896 = vmatprep.subr.mxu0 0.0
        %897 = vmatpush1.msra.mxu0 0.0
        %898 = vmatprep.subr.mxu0 0.0
        %899 = vmatpush1.msra.mxu0 0.0
        %900 = vmatprep.subr.mxu0 0.0
        %901 = vmatpush1.msra.mxu0 0.0
        %902 = vmatprep.subr.mxu0 0.0
        %903 = vmatpush1.msra.mxu0 0.0
        %904 = vmatprep.subr.mxu0 0.0
        %905 = vmatpush1.msra.mxu0 0.0
        %906 = vmatprep.subr.mxu0 0.0
        %907 = vmatpush1.msra.mxu0 0.0
        %908 = vmatprep.subr.mxu0 0.0
        %909 = vmatpush1.msra.mxu0 0.0
        %910 = vmatprep.mubr.f32.mxu0 0.0
        %911 = vmatmul.mubr.f32.gmra.mrb[0].mxu0 %v392
        %v912 = vpop.f32.mrb[0].mxu0
        %v913 = vadd.f32 0.0, %v912
        %v914 = vpop.f32.mrb[0].mxu0
        %915 = vdwg.mxu0
        %v917 = vsel %vm390, %v913, 0
        %919 = vmatprep.subr.mxu0 0.0
        %920 = vmatpush1.msra.mxu0 %v382
        %921 = vmatprep.subr.mxu0 0.0
        %922 = vmatpush1.msra.mxu0 %v383
        %923 = vmatprep.subr.mxu0 0.0
        %924 = vmatpush1.msra.mxu0 0.0
        %925 = vmatprep.subr.mxu0 0.0
        %926 = vmatpush1.msra.mxu0 0.0
        %927 = vmatprep.subr.mxu0 0.0
        %928 = vmatpush1.msra.mxu0 0.0
        %929 = vmatprep.subr.mxu0 0.0
        %930 = vmatpush1.msra.mxu0 0.0
        %931 = vmatprep.subr.mxu0 0.0
        %932 = vmatpush1.msra.mxu0 0.0
        %933 = vmatprep.subr.mxu0 0.0
        %934 = vmatpush1.msra.mxu0 0.0
        %935 = vmatprep.subr.mxu0 0.0
        %936 = vmatpush1.msra.mxu0 0.0
        %937 = vmatprep.subr.mxu0 0.0
        %938 = vmatpush1.msra.mxu0 0.0
        %939 = vmatprep.subr.mxu0 0.0
        %940 = vmatpush1.msra.mxu0 0.0
        %941 = vmatprep.subr.mxu0 0.0
        %942 = vmatpush1.msra.mxu0 0.0
        %943 = vmatprep.subr.mxu0 0.0
        %944 = vmatpush1.msra.mxu0 0.0
        %945 = vmatprep.subr.mxu0 0.0
        %946 = vmatpush1.msra.mxu0 0.0
        %947 = vmatprep.subr.mxu0 0.0
        %948 = vmatpush1.msra.mxu0 0.0
        %949 = vmatprep.subr.mxu0 0.0
        %950 = vmatpush1.msra.mxu0 0.0
        %951 = vmatprep.subr.mxu0 0.0
        %952 = vmatpush1.msra.mxu0 0.0
        %953 = vmatprep.subr.mxu0 0.0
        %954 = vmatpush1.msra.mxu0 0.0
        %955 = vmatprep.subr.mxu0 0.0
        %956 = vmatpush1.msra.mxu0 0.0
        %957 = vmatprep.subr.mxu0 0.0
        %958 = vmatpush1.msra.mxu0 0.0
        %959 = vmatprep.subr.mxu0 0.0
        %960 = vmatpush1.msra.mxu0 0.0
        %961 = vmatprep.subr.mxu0 0.0
        %962 = vmatpush1.msra.mxu0 0.0
        %963 = vmatprep.subr.mxu0 0.0
        %964 = vmatpush1.msra.mxu0 0.0
        %965 = vmatprep.subr.mxu0 0.0
        %966 = vmatpush1.msra.mxu0 0.0
        %967 = vmatprep.subr.mxu0 0.0
        %968 = vmatpush1.msra.mxu0 0.0
        %969 = vmatprep.subr.mxu0 0.0
        %970 = vmatpush1.msra.mxu0 0.0
        %971 = vmatprep.subr.mxu0 0.0
        %972 = vmatpush1.msra.mxu0 0.0
        %973 = vmatprep.subr.mxu0 0.0
        %974 = vmatpush1.msra.mxu0 0.0
        %975 = vmatprep.subr.mxu0 0.0
        %976 = vmatpush1.msra.mxu0 0.0
        %977 = vmatprep.subr.mxu0 0.0
        %978 = vmatpush1.msra.mxu0 0.0
        %979 = vmatprep.subr.mxu0 0.0
        %980 = vmatpush1.msra.mxu0 0.0
        %981 = vmatprep.subr.mxu0 0.0
        %982 = vmatpush1.msra.mxu0 0.0
        %983 = vmatprep.mubr.f32.mxu0 0.0
        %984 = vmatmul.mubr.f32.gmra.mrb[0].mxu0 %v917
        %v985 = vpop.f32.mrb[0].mxu0
        %v986 = vadd.f32 0.0, %v985
        %v987 = vpop.f32.mrb[0].mxu0
        %988 = vdwg.mxu0
        %989 = vmatprep.subr.mxu0 0.0
        %990 = vmatpush1.msra.mxu0 %v986
        %991 = vmatprep.subr.mxu0 0.0
        %992 = vmatpush1.msra.mxu0 0.0
        %993 = vmatprep.subr.mxu0 0.0
        %994 = vmatpush1.msra.mxu0 0.0
        %995 = vmatprep.subr.mxu0 0.0
        %996 = vmatpush1.msra.mxu0 0.0
        %997 = vmatprep.subr.mxu0 0.0
        %998 = vmatpush1.msra.mxu0 0.0
        %999 = vmatprep.subr.mxu0 0.0
        %1000 = vmatpush1.msra.mxu0 0.0
        %1001 = vmatprep.subr.mxu0 0.0
        %1002 = vmatpush1.msra.mxu0 0.0
        %1003 = vmatprep.subr.mxu0 0.0
        %1004 = vmatpush1.msra.mxu0 0.0
        %1005 = vmatprep.subr.mxu0 0.0
        %1006 = vmatpush1.msra.mxu0 0.0
        %1007 = vmatprep.subr.mxu0 0.0
        %1008 = vmatpush1.msra.mxu0 0.0
        %1009 = vmatprep.subr.mxu0 0.0
        %1010 = vmatpush1.msra.mxu0 0.0
        %1011 = vmatprep.subr.mxu0 0.0
        %1012 = vmatpush1.msra.mxu0 0.0
        %1013 = vmatprep.subr.mxu0 0.0
        %1014 = vmatpush1.msra.mxu0 0.0
        %1015 = vmatprep.subr.mxu0 0.0
        %1016 = vmatpush1.msra.mxu0 0.0
        %1017 = vmatprep.subr.mxu0 0.0
        %1018 = vmatpush1.msra.mxu0 0.0
        %1019 = vmatprep.subr.mxu0 0.0
        %1020 = vmatpush1.msra.mxu0 0.0
        %1021 = vmatprep.subr.mxu0 0.0
        %1022 = vmatpush1.msra.mxu0 0.0
        %1023 = vmatprep.subr.mxu0 0.0
        %1024 = vmatpush1.msra.mxu0 0.0
        %1025 = vmatprep.subr.mxu0 0.0
        %1026 = vmatpush1.msra.mxu0 0.0
        %1027 = vmatprep.subr.mxu0 0.0
        %1028 = vmatpush1.msra.mxu0 0.0
        %1029 = vmatprep.subr.mxu0 0.0
        %1030 = vmatpush1.msra.mxu0 0.0
        %1031 = vmatprep.subr.mxu0 0.0
        %1032 = vmatpush1.msra.mxu0 0.0
        %1033 = vmatprep.subr.mxu0 0.0
        %1034 = vmatpush1.msra.mxu0 0.0
        %1035 = vmatprep.subr.mxu0 0.0
        %1036 = vmatpush1.msra.mxu0 0.0
        %1037 = vmatprep.subr.mxu0 0.0
        %1038 = vmatpush1.msra.mxu0 0.0
        %1039 = vmatprep.subr.mxu0 0.0
        %1040 = vmatpush1.msra.mxu0 0.0
        %1041 = vmatprep.subr.mxu0 0.0
        %1042 = vmatpush1.msra.mxu0 0.0
        %1043 = vmatprep.subr.mxu0 0.0
        %1044 = vmatpush1.msra.mxu0 0.0
        %1045 = vmatprep.subr.mxu0 0.0
        %1046 = vmatpush1.msra.mxu0 0.0
        %1047 = vmatprep.subr.mxu0 0.0
        %1048 = vmatpush1.msra.mxu0 0.0
        %1049 = vmatprep.subr.mxu0 0.0
        %1050 = vmatpush1.msra.mxu0 0.0
        %1051 = vmatprep.subr.mxu0 0.0
        %1052 = vmatpush1.msra.mxu0 0.0
        %1053 = vmatprep.mubr.f32.mxu0 0.0
        %1054 = vmatmul.mubr.f32.gmra.mrb[0].mxu0 %v539
        %v1055 = vpop.f32.mrb[0].mxu0
        %v1056 = vadd.f32 0.0, %v1055
        %v1057 = vpop.f32.mrb[0].mxu0
        %1058 = vdwg.mxu0
        %v1060 = vsel %vm537, %v1056, 0
        %1062 = vmatprep.subr.mxu0 0.0
        %1063 = vmatpush1.msra.mxu0 %v385
        %1064 = vmatprep.subr.mxu0 0.0
        %1065 = vmatpush1.msra.mxu0 0.0
        %1066 = vmatprep.subr.mxu0 0.0
        %1067 = vmatpush1.msra.mxu0 0.0
        %1068 = vmatprep.subr.mxu0 0.0
        %1069 = vmatpush1.msra.mxu0 0.0
        %1070 = vmatprep.subr.mxu0 0.0
        %1071 = vmatpush1.msra.mxu0 0.0
        %1072 = vmatprep.subr.mxu0 0.0
        %1073 = vmatpush1.msra.mxu0 0.0
        %1074 = vmatprep.subr.mxu0 0.0
        %1075 = vmatpush1.msra.mxu0 0.0
        %1076 = vmatprep.subr.mxu0 0.0
        %1077 = vmatpush1.msra.mxu0 0.0
        %1078 = vmatprep.subr.mxu0 0.0
        %1079 = vmatpush1.msra.mxu0 0.0
        %1080 = vmatprep.subr.mxu0 0.0
        %1081 = vmatpush1.msra.mxu0 0.0
        %1082 = vmatprep.subr.mxu0 0.0
        %1083 = vmatpush1.msra.mxu0 0.0
        %1084 = vmatprep.subr.mxu0 0.0
        %1085 = vmatpush1.msra.mxu0 0.0
        %1086 = vmatprep.subr.mxu0 0.0
        %1087 = vmatpush1.msra.mxu0 0.0
        %1088 = vmatprep.subr.mxu0 0.0
        %1089 = vmatpush1.msra.mxu0 0.0
        %1090 = vmatprep.subr.mxu0 0.0
        %1091 = vmatpush1.msra.mxu0 0.0
        %1092 = vmatprep.subr.mxu0 0.0
        %1093 = vmatpush1.msra.mxu0 0.0
        %1094 = vmatprep.subr.mxu0 0.0
        %1095 = vmatpush1.msra.mxu0 0.0
        %1096 = vmatprep.subr.mxu0 0.0
        %1097 = vmatpush1.msra.mxu0 0.0
        %1098 = vmatprep.subr.mxu0 0.0
        %1099 = vmatpush1.msra.mxu0 0.0
        %1100 = vmatprep.subr.mxu0 0.0
        %1101 = vmatpush1.msra.mxu0 0.0
        %1102 = vmatprep.subr.mxu0 0.0
        %1103 = vmatpush1.msra.mxu0 0.0
        %1104 = vmatprep.subr.mxu0 0.0
        %1105 = vmatpush1.msra.mxu0 0.0
        %1106 = vmatprep.subr.mxu0 0.0
        %1107 = vmatpush1.msra.mxu0 0.0
        %1108 = vmatprep.subr.mxu0 0.0
        %1109 = vmatpush1.msra.mxu0 0.0
        %1110 = vmatprep.subr.mxu0 0.0
        %1111 = vmatpush1.msra.mxu0 0.0
        %1112 = vmatprep.subr.mxu0 0.0
        %1113 = vmatpush1.msra.mxu0 0.0
        %1114 = vmatprep.subr.mxu0 0.0
        %1115 = vmatpush1.msra.mxu0 0.0
        %1116 = vmatprep.subr.mxu0 0.0
        %1117 = vmatpush1.msra.mxu0 0.0
        %1118 = vmatprep.subr.mxu0 0.0
        %1119 = vmatpush1.msra.mxu0 0.0
        %1120 = vmatprep.subr.mxu0 0.0
        %1121 = vmatpush1.msra.mxu0 0.0
        %1122 = vmatprep.subr.mxu0 0.0
        %1123 = vmatpush1.msra.mxu0 0.0
        %1124 = vmatprep.subr.mxu0 0.0
        %1125 = vmatpush1.msra.mxu0 0.0
        %1126 = vmatprep.mubr.f32.mxu0 0.0
        %1127 = vmatmul.mubr.f32.gmra.mrb[0].mxu0 %v1060
        %v1128 = vpop.f32.mrb[0].mxu0
        %v1129 = vadd.f32 0.0, %v1128
        %v1130 = vpop.f32.mrb[0].mxu0
        %1131 = vdwg.mxu0
        %v1133 = vsel %vm688, %v1129, 0
        %1135 = vmatprep.subr.mxu0 0.0
        %1136 = vmatpush1.msra.mxu0 %v1133
        %1137 = vmatprep.subr.mxu0 0.0
        %1138 = vmatpush1.msra.mxu0 0.0
        %1139 = vmatprep.subr.mxu0 0.0
        %1140 = vmatpush1.msra.mxu0 0.0
        %1141 = vmatprep.subr.mxu0 0.0
        %1142 = vmatpush1.msra.mxu0 0.0
        %1143 = vmatprep.subr.mxu0 0.0
        %1144 = vmatpush1.msra.mxu0 0.0
        %1145 = vmatprep.subr.mxu0 0.0
        %1146 = vmatpush1.msra.mxu0 0.0
        %1147 = vmatprep.subr.mxu0 0.0
        %1148 = vmatpush1.msra.mxu0 0.0
        %1149 = vmatprep.subr.mxu0 0.0
        %1150 = vmatpush1.msra.mxu0 0.0
        %1151 = vmatprep.subr.mxu0 0.0
        %1152 = vmatpush1.msra.mxu0 0.0
        %1153 = vmatprep.subr.mxu0 0.0
        %1154 = vmatpush1.msra.mxu0 0.0
        %1155 = vmatprep.subr.mxu0 0.0
        %1156 = vmatpush1.msra.mxu0 0.0
        %1157 = vmatprep.subr.mxu0 0.0
        %1158 = vmatpush1.msra.mxu0 0.0
        %1159 = vmatprep.subr.mxu0 0.0
        %1160 = vmatpush1.msra.mxu0 0.0
        %1161 = vmatprep.subr.mxu0 0.0
        %1162 = vmatpush1.msra.mxu0 0.0
        %1163 = vmatprep.subr.mxu0 0.0
        %1164 = vmatpush1.msra.mxu0 0.0
        %1165 = vmatprep.subr.mxu0 0.0
        %1166 = vmatpush1.msra.mxu0 0.0
        %1167 = vmatprep.subr.mxu0 0.0
        %1168 = vmatpush1.msra.mxu0 0.0
        %1169 = vmatprep.subr.mxu0 0.0
        %1170 = vmatpush1.msra.mxu0 0.0
        %1171 = vmatprep.subr.mxu0 0.0
        %1172 = vmatpush1.msra.mxu0 0.0
        %1173 = vmatprep.subr.mxu0 0.0
        %1174 = vmatpush1.msra.mxu0 0.0
        %1175 = vmatprep.subr.mxu0 0.0
        %1176 = vmatpush1.msra.mxu0 0.0
        %1177 = vmatprep.subr.mxu0 0.0
        %1178 = vmatpush1.msra.mxu0 0.0
        %1179 = vmatprep.subr.mxu0 0.0
        %1180 = vmatpush1.msra.mxu0 0.0
        %1181 = vmatprep.subr.mxu0 0.0
        %1182 = vmatpush1.msra.mxu0 0.0
        %1183 = vmatprep.subr.mxu0 0.0
        %1184 = vmatpush1.msra.mxu0 0.0
        %1185 = vmatprep.subr.mxu0 0.0
        %1186 = vmatpush1.msra.mxu0 0.0
        %1187 = vmatprep.subr.mxu0 0.0
        %1188 = vmatpush1.msra.mxu0 0.0
        %1189 = vmatprep.subr.mxu0 0.0
        %1190 = vmatpush1.msra.mxu0 0.0
        %1191 = vmatprep.subr.mxu0 0.0
        %1192 = vmatpush1.msra.mxu0 0.0
        %1193 = vmatprep.subr.mxu0 0.0
        %1194 = vmatpush1.msra.mxu0 0.0
        %1195 = vmatprep.subr.mxu0 0.0
        %1196 = vmatpush1.msra.mxu0 0.0
        %1197 = vmatprep.subr.mxu0 0.0
        %1198 = vmatpush1.msra.mxu0 0.0
        %1199 = vmatprep.mubr.f32.mxu0 0.0
        %1200 = vmatmul.mubr.f32.gmra.mrb[0].mxu0 %v686
        %v1201 = vpop.f32.mrb[0].mxu0
        %v1202 = vadd.f32 0.0, %v1201
        %v1203 = vpop.f32.mrb[0].mxu0
        %1204 = vdwg.mxu0
        %v1206 = vsel %vm684, %v1202, 0
        %1208 = vmatprep.subr.mxu0 0.0
        %1209 = vmatpush1.msra.mxu0 %v766
        %1210 = vmatprep.subr.mxu0 0.0
        %1211 = vmatpush1.msra.mxu0 0.0
        %1212 = vmatprep.subr.mxu0 0.0
        %1213 = vmatpush1.msra.mxu0 0.0
        %1214 = vmatprep.subr.mxu0 0.0
        %1215 = vmatpush1.msra.mxu0 0.0
        %1216 = vmatprep.subr.mxu0 0.0
        %1217 = vmatpush1.msra.mxu0 0.0
        %1218 = vmatprep.subr.mxu0 0.0
        %1219 = vmatpush1.msra.mxu0 0.0
        %1220 = vmatprep.subr.mxu0 0.0
        %1221 = vmatpush1.msra.mxu0 0.0
        %1222 = vmatprep.subr.mxu0 0.0
        %1223 = vmatpush1.msra.mxu0 0.0
        %1224 = vmatprep.subr.mxu0 0.0
        %1225 = vmatpush1.msra.mxu0 0.0
        %1226 = vmatprep.subr.mxu0 0.0
        %1227 = vmatpush1.msra.mxu0 0.0
        %1228 = vmatprep.subr.mxu0 0.0
        %1229 = vmatpush1.msra.mxu0 0.0
        %1230 = vmatprep.subr.mxu0 0.0
        %1231 = vmatpush1.msra.mxu0 0.0
        %1232 = vmatprep.subr.mxu0 0.0
        %1233 = vmatpush1.msra.mxu0 0.0
        %1234 = vmatprep.subr.mxu0 0.0
        %1235 = vmatpush1.msra.mxu0 0.0
        %1236 = vmatprep.subr.mxu0 0.0
        %1237 = vmatpush1.msra.mxu0 0.0
        %1238 = vmatprep.subr.mxu0 0.0
        %1239 = vmatpush1.msra.mxu0 0.0
        %1240 = vmatprep.subr.mxu0 0.0
        %1241 = vmatpush1.msra.mxu0 0.0
        %1242 = vmatprep.subr.mxu0 0.0
        %1243 = vmatpush1.msra.mxu0 0.0
        %1244 = vmatprep.subr.mxu0 0.0
        %1245 = vmatpush1.msra.mxu0 0.0
        %1246 = vmatprep.subr.mxu0 0.0
        %1247 = vmatpush1.msra.mxu0 0.0
        %1248 = vmatprep.subr.mxu0 0.0
        %1249 = vmatpush1.msra.mxu0 0.0
        %1250 = vmatprep.subr.mxu0 0.0
        %1251 = vmatpush1.msra.mxu0 0.0
        %1252 = vmatprep.subr.mxu0 0.0
        %1253 = vmatpush1.msra.mxu0 0.0
        %1254 = vmatprep.subr.mxu0 0.0
        %1255 = vmatpush1.msra.mxu0 0.0
        %1256 = vmatprep.subr.mxu0 0.0
        %1257 = vmatpush1.msra.mxu0 0.0
        %1258 = vmatprep.subr.mxu0 0.0
        %1259 = vmatpush1.msra.mxu0 0.0
        %1260 = vmatprep.subr.mxu0 0.0
        %1261 = vmatpush1.msra.mxu0 0.0
        %1262 = vmatprep.subr.mxu0 0.0
        %1263 = vmatpush1.msra.mxu0 0.0
        %1264 = vmatprep.subr.mxu0 0.0
        %1265 = vmatpush1.msra.mxu0 0.0
        %1266 = vmatprep.subr.mxu0 0.0
        %1267 = vmatpush1.msra.mxu0 0.0
        %1268 = vmatprep.subr.mxu0 0.0
        %1269 = vmatpush1.msra.mxu0 0.0
        %1270 = vmatprep.subr.mxu0 0.0
        %1271 = vmatpush1.msra.mxu0 0.0
        %1272 = vmatprep.mubr.f32.mxu0 0.0
        %1273 = vmatmul.mubr.f32.gmra.mrb[0].mxu0 %v1206
        %v1274 = vpop.f32.mrb[0].mxu0
        %v1275 = vadd.f32 0.0, %v1274
        %v1276 = vpop.f32.mrb[0].mxu0
        %1277 = vdwg.mxu0
        %s1278 = scalar_lea.vmem %s352, 8 [#allocation5]
        %1279 = vst.msk [vmem:[%s1278] sm:$0xff] %vm537, %v986
        %s1280 = scalar_lea.vmem %s373, 4
        %1281 = vst.msk [vmem:[%s1280] sm:$0xf] %vm839, %v1129
        %s1282 = scalar_lea.vmem %s379, 2
        %1283 = vst.msk [vmem:[%s1282] sm:$0x3] %vm841, %v1275
        %s1284 = scalar_lea.vmem %s322, 32 [#allocation2]
        %v1285 = vld [vmem:[%s1284] sm:$0xff]
        %v1286 = vld [vmem:[%s1284 + $0x8] sm:$0xff]
        %1287 = vmatprep.subr.mxu0 0.0
        %1288 = vmatpush1.msra.mxu0 %v1285
        %1289 = vmatprep.subr.mxu0 0.0
        %1290 = vmatpush1.msra.mxu0 %v1286
        %1291 = vmatprep.subr.mxu0 0.0
        %1292 = vmatpush1.msra.mxu0 0.0
        %1293 = vmatprep.subr.mxu0 0.0
        %1294 = vmatpush1.msra.mxu0 0.0
        %1295 = vmatprep.subr.mxu0 0.0
        %1296 = vmatpush1.msra.mxu0 0.0
        %1297 = vmatprep.subr.mxu0 0.0
        %1298 = vmatpush1.msra.mxu0 0.0
        %1299 = vmatprep.subr.mxu0 0.0
        %1300 = vmatpush1.msra.mxu0 0.0
        %1301 = vmatprep.subr.mxu0 0.0
        %1302 = vmatpush1.msra.mxu0 0.0
        %1303 = vmatprep.subr.mxu0 0.0
        %1304 = vmatpush1.msra.mxu0 0.0
        %1305 = vmatprep.subr.mxu0 0.0
        %1306 = vmatpush1.msra.mxu0 0.0
        %1307 = vmatprep.subr.mxu0 0.0
        %1308 = vmatpush1.msra.mxu0 0.0
        %1309 = vmatprep.subr.mxu0 0.0
        %1310 = vmatpush1.msra.mxu0 0.0
        %1311 = vmatprep.subr.mxu0 0.0
        %1312 = vmatpush1.msra.mxu0 0.0
        %1313 = vmatprep.subr.mxu0 0.0
        %1314 = vmatpush1.msra.mxu0 0.0
        %1315 = vmatprep.subr.mxu0 0.0
        %1316 = vmatpush1.msra.mxu0 0.0
        %1317 = vmatprep.subr.mxu0 0.0
        %1318 = vmatpush1.msra.mxu0 0.0
        %1319 = vmatprep.subr.mxu0 0.0
        %1320 = vmatpush1.msra.mxu0 0.0
        %1321 = vmatprep.subr.mxu0 0.0
        %1322 = vmatpush1.msra.mxu0 0.0
        %1323 = vmatprep.subr.mxu0 0.0
        %1324 = vmatpush1.msra.mxu0 0.0
        %1325 = vmatprep.subr.mxu0 0.0
        %1326 = vmatpush1.msra.mxu0 0.0
        %1327 = vmatprep.subr.mxu0 0.0
        %1328 = vmatpush1.msra.mxu0 0.0
        %1329 = vmatprep.subr.mxu0 0.0
        %1330 = vmatpush1.msra.mxu0 0.0
        %1331 = vmatprep.subr.mxu0 0.0
        %1332 = vmatpush1.msra.mxu0 0.0
        %1333 = vmatprep.subr.mxu0 0.0
        %1334 = vmatpush1.msra.mxu0 0.0
        %1335 = vmatprep.subr.mxu0 0.0
        %1336 = vmatpush1.msra.mxu0 0.0
        %1337 = vmatprep.subr.mxu0 0.0
        %1338 = vmatpush1.msra.mxu0 0.0
        %1339 = vmatprep.subr.mxu0 0.0
        %1340 = vmatpush1.msra.mxu0 0.0
        %1341 = vmatprep.subr.mxu0 0.0
        %1342 = vmatpush1.msra.mxu0 0.0
        %1343 = vmatprep.subr.mxu0 0.0
        %1344 = vmatpush1.msra.mxu0 0.0
        %1345 = vmatprep.subr.mxu0 0.0
        %1346 = vmatpush1.msra.mxu0 0.0
        %1347 = vmatprep.subr.mxu0 0.0
        %1348 = vmatpush1.msra.mxu0 0.0
        %1349 = vmatprep.subr.mxu0 0.0
        %1350 = vmatpush1.msra.mxu0 0.0
        %1351 = vmatprep.mubr.f32.mxu0 0.0
        %1352 = vmatmul.mubr.f32.gmra.mrb[0].mxu0 %v392
        %v1353 = vpop.f32.mrb[0].mxu0
        %v1354 = vadd.f32 0.0, %v1353
        %v1355 = vpop.f32.mrb[0].mxu0
        %1356 = vdwg.mxu0
        %v1358 = vsel %vm390, %v1354, 0
        %1360 = vmatprep.subr.mxu0 0.0
        %1361 = vmatpush1.msra.mxu0 %v382
        %1362 = vmatprep.subr.mxu0 0.0
        %1363 = vmatpush1.msra.mxu0 %v383
        %1364 = vmatprep.subr.mxu0 0.0
        %1365 = vmatpush1.msra.mxu0 0.0
        %1366 = vmatprep.subr.mxu0 0.0
        %1367 = vmatpush1.msra.mxu0 0.0
        %1368 = vmatprep.subr.mxu0 0.0
        %1369 = vmatpush1.msra.mxu0 0.0
        %1370 = vmatprep.subr.mxu0 0.0
        %1371 = vmatpush1.msra.mxu0 0.0
        %1372 = vmatprep.subr.mxu0 0.0
        %1373 = vmatpush1.msra.mxu0 0.0
        %1374 = vmatprep.subr.mxu0 0.0
        %1375 = vmatpush1.msra.mxu0 0.0
        %1376 = vmatprep.subr.mxu0 0.0
        %1377 = vmatpush1.msra.mxu0 0.0
        %1378 = vmatprep.subr.mxu0 0.0
        %1379 = vmatpush1.msra.mxu0 0.0
        %1380 = vmatprep.subr.mxu0 0.0
        %1381 = vmatpush1.msra.mxu0 0.0
        %1382 = vmatprep.subr.mxu0 0.0
        %1383 = vmatpush1.msra.mxu0 0.0
        %1384 = vmatprep.subr.mxu0 0.0
        %1385 = vmatpush1.msra.mxu0 0.0
        %1386 = vmatprep.subr.mxu0 0.0
        %1387 = vmatpush1.msra.mxu0 0.0
        %1388 = vmatprep.subr.mxu0 0.0
        %1389 = vmatpush1.msra.mxu0 0.0
        %1390 = vmatprep.subr.mxu0 0.0
        %1391 = vmatpush1.msra.mxu0 0.0
        %1392 = vmatprep.subr.mxu0 0.0
        %1393 = vmatpush1.msra.mxu0 0.0
        %1394 = vmatprep.subr.mxu0 0.0
        %1395 = vmatpush1.msra.mxu0 0.0
        %1396 = vmatprep.subr.mxu0 0.0
        %1397 = vmatpush1.msra.mxu0 0.0
        %1398 = vmatprep.subr.mxu0 0.0
        %1399 = vmatpush1.msra.mxu0 0.0
        %1400 = vmatprep.subr.mxu0 0.0
        %1401 = vmatpush1.msra.mxu0 0.0
        %1402 = vmatprep.subr.mxu0 0.0
        %1403 = vmatpush1.msra.mxu0 0.0
        %1404 = vmatprep.subr.mxu0 0.0
        %1405 = vmatpush1.msra.mxu0 0.0
        %1406 = vmatprep.subr.mxu0 0.0
        %1407 = vmatpush1.msra.mxu0 0.0
        %1408 = vmatprep.subr.mxu0 0.0
        %1409 = vmatpush1.msra.mxu0 0.0
        %1410 = vmatprep.subr.mxu0 0.0
        %1411 = vmatpush1.msra.mxu0 0.0
        %1412 = vmatprep.subr.mxu0 0.0
        %1413 = vmatpush1.msra.mxu0 0.0
        %1414 = vmatprep.subr.mxu0 0.0
        %1415 = vmatpush1.msra.mxu0 0.0
        %1416 = vmatprep.subr.mxu0 0.0
        %1417 = vmatpush1.msra.mxu0 0.0
        %1418 = vmatprep.subr.mxu0 0.0
        %1419 = vmatpush1.msra.mxu0 0.0
        %1420 = vmatprep.subr.mxu0 0.0
        %1421 = vmatpush1.msra.mxu0 0.0
        %1422 = vmatprep.subr.mxu0 0.0
        %1423 = vmatpush1.msra.mxu0 0.0
        %1424 = vmatprep.mubr.f32.mxu0 0.0
        %1425 = vmatmul.mubr.f32.gmra.mrb[0].mxu0 %v1358
        %v1426 = vpop.f32.mrb[0].mxu0
        %v1427 = vadd.f32 0.0, %v1426
        %v1428 = vpop.f32.mrb[0].mxu0
        %1429 = vdwg.mxu0
        %1430 = vmatprep.subr.mxu0 0.0
        %1431 = vmatpush1.msra.mxu0 %v1427
        %1432 = vmatprep.subr.mxu0 0.0
        %1433 = vmatpush1.msra.mxu0 0.0
        %1434 = vmatprep.subr.mxu0 0.0
        %1435 = vmatpush1.msra.mxu0 0.0
        %1436 = vmatprep.subr.mxu0 0.0
        %1437 = vmatpush1.msra.mxu0 0.0
        %1438 = vmatprep.subr.mxu0 0.0
        %1439 = vmatpush1.msra.mxu0 0.0
        %1440 = vmatprep.subr.mxu0 0.0
        %1441 = vmatpush1.msra.mxu0 0.0
        %1442 = vmatprep.subr.mxu0 0.0
        %1443 = vmatpush1.msra.mxu0 0.0
        %1444 = vmatprep.subr.mxu0 0.0
        %1445 = vmatpush1.msra.mxu0 0.0
        %1446 = vmatprep.subr.mxu0 0.0
        %1447 = vmatpush1.msra.mxu0 0.0
        %1448 = vmatprep.subr.mxu0 0.0
        %1449 = vmatpush1.msra.mxu0 0.0
        %1450 = vmatprep.subr.mxu0 0.0
        %1451 = vmatpush1.msra.mxu0 0.0
        %1452 = vmatprep.subr.mxu0 0.0
        %1453 = vmatpush1.msra.mxu0 0.0
        %1454 = vmatprep.subr.mxu0 0.0
        %1455 = vmatpush1.msra.mxu0 0.0
        %1456 = vmatprep.subr.mxu0 0.0
        %1457 = vmatpush1.msra.mxu0 0.0
        %1458 = vmatprep.subr.mxu0 0.0
        %1459 = vmatpush1.msra.mxu0 0.0
        %1460 = vmatprep.subr.mxu0 0.0
        %1461 = vmatpush1.msra.mxu0 0.0
        %1462 = vmatprep.subr.mxu0 0.0
        %1463 = vmatpush1.msra.mxu0 0.0
        %1464 = vmatprep.subr.mxu0 0.0
        %1465 = vmatpush1.msra.mxu0 0.0
        %1466 = vmatprep.subr.mxu0 0.0
        %1467 = vmatpush1.msra.mxu0 0.0
        %1468 = vmatprep.subr.mxu0 0.0
        %1469 = vmatpush1.msra.mxu0 0.0
        %1470 = vmatprep.subr.mxu0 0.0
        %1471 = vmatpush1.msra.mxu0 0.0
        %1472 = vmatprep.subr.mxu0 0.0
        %1473 = vmatpush1.msra.mxu0 0.0
        %1474 = vmatprep.subr.mxu0 0.0
        %1475 = vmatpush1.msra.mxu0 0.0
        %1476 = vmatprep.subr.mxu0 0.0
        %1477 = vmatpush1.msra.mxu0 0.0
        %1478 = vmatprep.subr.mxu0 0.0
        %1479 = vmatpush1.msra.mxu0 0.0
        %1480 = vmatprep.subr.mxu0 0.0
        %1481 = vmatpush1.msra.mxu0 0.0
        %1482 = vmatprep.subr.mxu0 0.0
        %1483 = vmatpush1.msra.mxu0 0.0
        %1484 = vmatprep.subr.mxu0 0.0
        %1485 = vmatpush1.msra.mxu0 0.0
        %1486 = vmatprep.subr.mxu0 0.0
        %1487 = vmatpush1.msra.mxu0 0.0
        %1488 = vmatprep.subr.mxu0 0.0
        %1489 = vmatpush1.msra.mxu0 0.0
        %1490 = vmatprep.subr.mxu0 0.0
        %1491 = vmatpush1.msra.mxu0 0.0
        %1492 = vmatprep.subr.mxu0 0.0
        %1493 = vmatpush1.msra.mxu0 0.0
        %1494 = vmatprep.mubr.f32.mxu0 0.0
        %1495 = vmatmul.mubr.f32.gmra.mrb[0].mxu0 %v539
        %v1496 = vpop.f32.mrb[0].mxu0
        %v1497 = vadd.f32 0.0, %v1496
        %v1498 = vpop.f32.mrb[0].mxu0
        %1499 = vdwg.mxu0
        %v1501 = vsel %vm537, %v1497, 0
        %1503 = vmatprep.subr.mxu0 0.0
        %1504 = vmatpush1.msra.mxu0 %v385
        %1505 = vmatprep.subr.mxu0 0.0
        %1506 = vmatpush1.msra.mxu0 0.0
        %1507 = vmatprep.subr.mxu0 0.0
        %1508 = vmatpush1.msra.mxu0 0.0
        %1509 = vmatprep.subr.mxu0 0.0
        %1510 = vmatpush1.msra.mxu0 0.0
        %1511 = vmatprep.subr.mxu0 0.0
        %1512 = vmatpush1.msra.mxu0 0.0
        %1513 = vmatprep.subr.mxu0 0.0
        %1514 = vmatpush1.msra.mxu0 0.0
        %1515 = vmatprep.subr.mxu0 0.0
        %1516 = vmatpush1.msra.mxu0 0.0
        %1517 = vmatprep.subr.mxu0 0.0
        %1518 = vmatpush1.msra.mxu0 0.0
        %1519 = vmatprep.subr.mxu0 0.0
        %1520 = vmatpush1.msra.mxu0 0.0
        %1521 = vmatprep.subr.mxu0 0.0
        %1522 = vmatpush1.msra.mxu0 0.0
        %1523 = vmatprep.subr.mxu0 0.0
        %1524 = vmatpush1.msra.mxu0 0.0
        %1525 = vmatprep.subr.mxu0 0.0
        %1526 = vmatpush1.msra.mxu0 0.0
        %1527 = vmatprep.subr.mxu0 0.0
        %1528 = vmatpush1.msra.mxu0 0.0
        %1529 = vmatprep.subr.mxu0 0.0
        %1530 = vmatpush1.msra.mxu0 0.0
        %1531 = vmatprep.subr.mxu0 0.0
        %1532 = vmatpush1.msra.mxu0 0.0
        %1533 = vmatprep.subr.mxu0 0.0
        %1534 = vmatpush1.msra.mxu0 0.0
        %1535 = vmatprep.subr.mxu0 0.0
        %1536 = vmatpush1.msra.mxu0 0.0
        %1537 = vmatprep.subr.mxu0 0.0
        %1538 = vmatpush1.msra.mxu0 0.0
        %1539 = vmatprep.subr.mxu0 0.0
        %1540 = vmatpush1.msra.mxu0 0.0
        %1541 = vmatprep.subr.mxu0 0.0
        %1542 = vmatpush1.msra.mxu0 0.0
        %1543 = vmatprep.subr.mxu0 0.0
        %1544 = vmatpush1.msra.mxu0 0.0
        %1545 = vmatprep.subr.mxu0 0.0
        %1546 = vmatpush1.msra.mxu0 0.0
        %1547 = vmatprep.subr.mxu0 0.0
        %1548 = vmatpush1.msra.mxu0 0.0
        %1549 = vmatprep.subr.mxu0 0.0
        %1550 = vmatpush1.msra.mxu0 0.0
        %1551 = vmatprep.subr.mxu0 0.0
        %1552 = vmatpush1.msra.mxu0 0.0
        %1553 = vmatprep.subr.mxu0 0.0
        %1554 = vmatpush1.msra.mxu0 0.0
        %1555 = vmatprep.subr.mxu0 0.0
        %1556 = vmatpush1.msra.mxu0 0.0
        %1557 = vmatprep.subr.mxu0 0.0
        %1558 = vmatpush1.msra.mxu0 0.0
        %1559 = vmatprep.subr.mxu0 0.0
        %1560 = vmatpush1.msra.mxu0 0.0
        %1561 = vmatprep.subr.mxu0 0.0
        %1562 = vmatpush1.msra.mxu0 0.0
        %1563 = vmatprep.subr.mxu0 0.0
        %1564 = vmatpush1.msra.mxu0 0.0
        %1565 = vmatprep.subr.mxu0 0.0
        %1566 = vmatpush1.msra.mxu0 0.0
        %1567 = vmatprep.mubr.f32.mxu0 0.0
        %1568 = vmatmul.mubr.f32.gmra.mrb[0].mxu0 %v1501
        %v1569 = vpop.f32.mrb[0].mxu0
        %v1570 = vadd.f32 0.0, %v1569
        %v1571 = vpop.f32.mrb[0].mxu0
        %1572 = vdwg.mxu0
        %v1574 = vsel %vm688, %v1570, 0
        %1576 = vmatprep.subr.mxu0 0.0
        %1577 = vmatpush1.msra.mxu0 %v1574
        %1578 = vmatprep.subr.mxu0 0.0
        %1579 = vmatpush1.msra.mxu0 0.0
        %1580 = vmatprep.subr.mxu0 0.0
        %1581 = vmatpush1.msra.mxu0 0.0
        %1582 = vmatprep.subr.mxu0 0.0
        %1583 = vmatpush1.msra.mxu0 0.0
        %1584 = vmatprep.subr.mxu0 0.0
        %1585 = vmatpush1.msra.mxu0 0.0
        %1586 = vmatprep.subr.mxu0 0.0
        %1587 = vmatpush1.msra.mxu0 0.0
        %1588 = vmatprep.subr.mxu0 0.0
        %1589 = vmatpush1.msra.mxu0 0.0
        %1590 = vmatprep.subr.mxu0 0.0
        %1591 = vmatpush1.msra.mxu0 0.0
        %1592 = vmatprep.subr.mxu0 0.0
        %1593 = vmatpush1.msra.mxu0 0.0
        %1594 = vmatprep.subr.mxu0 0.0
        %1595 = vmatpush1.msra.mxu0 0.0
        %1596 = vmatprep.subr.mxu0 0.0
        %1597 = vmatpush1.msra.mxu0 0.0
        %1598 = vmatprep.subr.mxu0 0.0
        %1599 = vmatpush1.msra.mxu0 0.0
        %1600 = vmatprep.subr.mxu0 0.0
        %1601 = vmatpush1.msra.mxu0 0.0
        %1602 = vmatprep.subr.mxu0 0.0
        %1603 = vmatpush1.msra.mxu0 0.0
        %1604 = vmatprep.subr.mxu0 0.0
        %1605 = vmatpush1.msra.mxu0 0.0
        %1606 = vmatprep.subr.mxu0 0.0
        %1607 = vmatpush1.msra.mxu0 0.0
        %1608 = vmatprep.subr.mxu0 0.0
        %1609 = vmatpush1.msra.mxu0 0.0
        %1610 = vmatprep.subr.mxu0 0.0
        %1611 = vmatpush1.msra.mxu0 0.0
        %1612 = vmatprep.subr.mxu0 0.0
        %1613 = vmatpush1.msra.mxu0 0.0
        %1614 = vmatprep.subr.mxu0 0.0
        %1615 = vmatpush1.msra.mxu0 0.0
        %1616 = vmatprep.subr.mxu0 0.0
        %1617 = vmatpush1.msra.mxu0 0.0
        %1618 = vmatprep.subr.mxu0 0.0
        %1619 = vmatpush1.msra.mxu0 0.0
        %1620 = vmatprep.subr.mxu0 0.0
        %1621 = vmatpush1.msra.mxu0 0.0
        %1622 = vmatprep.subr.mxu0 0.0
        %1623 = vmatpush1.msra.mxu0 0.0
        %1624 = vmatprep.subr.mxu0 0.0
        %1625 = vmatpush1.msra.mxu0 0.0
        %1626 = vmatprep.subr.mxu0 0.0
        %1627 = vmatpush1.msra.mxu0 0.0
        %1628 = vmatprep.subr.mxu0 0.0
        %1629 = vmatpush1.msra.mxu0 0.0
        %1630 = vmatprep.subr.mxu0 0.0
        %1631 = vmatpush1.msra.mxu0 0.0
        %1632 = vmatprep.subr.mxu0 0.0
        %1633 = vmatpush1.msra.mxu0 0.0
        %1634 = vmatprep.subr.mxu0 0.0
        %1635 = vmatpush1.msra.mxu0 0.0
        %1636 = vmatprep.subr.mxu0 0.0
        %1637 = vmatpush1.msra.mxu0 0.0
        %1638 = vmatprep.subr.mxu0 0.0
        %1639 = vmatpush1.msra.mxu0 0.0
        %1640 = vmatprep.mubr.f32.mxu0 0.0
        %1641 = vmatmul.mubr.f32.gmra.mrb[0].mxu0 %v686
        %v1642 = vpop.f32.mrb[0].mxu0
        %v1643 = vadd.f32 0.0, %v1642
        %v1644 = vpop.f32.mrb[0].mxu0
        %1645 = vdwg.mxu0
        %v1647 = vsel %vm684, %v1643, 0
        %1649 = vmatprep.subr.mxu0 0.0
        %1650 = vmatpush1.msra.mxu0 %v766
        %1651 = vmatprep.subr.mxu0 0.0
        %1652 = vmatpush1.msra.mxu0 0.0
        %1653 = vmatprep.subr.mxu0 0.0
        %1654 = vmatpush1.msra.mxu0 0.0
        %1655 = vmatprep.subr.mxu0 0.0
        %1656 = vmatpush1.msra.mxu0 0.0
        %1657 = vmatprep.subr.mxu0 0.0
        %1658 = vmatpush1.msra.mxu0 0.0
        %1659 = vmatprep.subr.mxu0 0.0
        %1660 = vmatpush1.msra.mxu0 0.0
        %1661 = vmatprep.subr.mxu0 0.0
        %1662 = vmatpush1.msra.mxu0 0.0
        %1663 = vmatprep.subr.mxu0 0.0
        %1664 = vmatpush1.msra.mxu0 0.0
        %1665 = vmatprep.subr.mxu0 0.0
        %1666 = vmatpush1.msra.mxu0 0.0
        %1667 = vmatprep.subr.mxu0 0.0
        %1668 = vmatpush1.msra.mxu0 0.0
        %1669 = vmatprep.subr.mxu0 0.0
        %1670 = vmatpush1.msra.mxu0 0.0
        %1671 = vmatprep.subr.mxu0 0.0
        %1672 = vmatpush1.msra.mxu0 0.0
        %1673 = vmatprep.subr.mxu0 0.0
        %1674 = vmatpush1.msra.mxu0 0.0
        %1675 = vmatprep.subr.mxu0 0.0
        %1676 = vmatpush1.msra.mxu0 0.0
        %1677 = vmatprep.subr.mxu0 0.0
        %1678 = vmatpush1.msra.mxu0 0.0
        %1679 = vmatprep.subr.mxu0 0.0
        %1680 = vmatpush1.msra.mxu0 0.0
        %1681 = vmatprep.subr.mxu0 0.0
        %1682 = vmatpush1.msra.mxu0 0.0
        %1683 = vmatprep.subr.mxu0 0.0
        %1684 = vmatpush1.msra.mxu0 0.0
        %1685 = vmatprep.subr.mxu0 0.0
        %1686 = vmatpush1.msra.mxu0 0.0
        %1687 = vmatprep.subr.mxu0 0.0
        %1688 = vmatpush1.msra.mxu0 0.0
        %1689 = vmatprep.subr.mxu0 0.0
        %1690 = vmatpush1.msra.mxu0 0.0
        %1691 = vmatprep.subr.mxu0 0.0
        %1692 = vmatpush1.msra.mxu0 0.0
        %1693 = vmatprep.subr.mxu0 0.0
        %1694 = vmatpush1.msra.mxu0 0.0
        %1695 = vmatprep.subr.mxu0 0.0
        %1696 = vmatpush1.msra.mxu0 0.0
        %1697 = vmatprep.subr.mxu0 0.0
        %1698 = vmatpush1.msra.mxu0 0.0
        %1699 = vmatprep.subr.mxu0 0.0
        %1700 = vmatpush1.msra.mxu0 0.0
        %1701 = vmatprep.subr.mxu0 0.0
        %1702 = vmatpush1.msra.mxu0 0.0
        %1703 = vmatprep.subr.mxu0 0.0
        %1704 = vmatpush1.msra.mxu0 0.0
        %1705 = vmatprep.subr.mxu0 0.0
        %1706 = vmatpush1.msra.mxu0 0.0
        %1707 = vmatprep.subr.mxu0 0.0
        %1708 = vmatpush1.msra.mxu0 0.0
        %1709 = vmatprep.subr.mxu0 0.0
        %1710 = vmatpush1.msra.mxu0 0.0
        %1711 = vmatprep.subr.mxu0 0.0
        %1712 = vmatpush1.msra.mxu0 0.0
        %1713 = vmatprep.mubr.f32.mxu0 0.0
        %1714 = vmatmul.mubr.f32.gmra.mrb[0].mxu0 %v1647
        %v1715 = vpop.f32.mrb[0].mxu0
        %v1716 = vadd.f32 0.0, %v1715
        %v1717 = vpop.f32.mrb[0].mxu0
        %1718 = vdwg.mxu0
        %s1719 = scalar_lea.vmem %s352, 16 [#allocation5]
        %1720 = vst.msk [vmem:[%s1719] sm:$0xff] %vm537, %v1427
        %s1721 = scalar_lea.vmem %s373, 8
        %1722 = vst.msk [vmem:[%s1721] sm:$0xf] %vm839, %v1570
        %s1723 = scalar_lea.vmem %s379, 4
        %1724 = vst.msk [vmem:[%s1723] sm:$0x3] %vm841, %v1716
        %s1725 = scalar_lea.vmem %s322, 48 [#allocation2]
        %v1726 = vld [vmem:[%s1725] sm:$0xff]
        %v1727 = vld [vmem:[%s1725 + $0x8] sm:$0xff]
        %1728 = vmatprep.subr.mxu0 0.0
        %1729 = vmatpush1.msra.mxu0 %v1726
        %1730 = vmatprep.subr.mxu0 0.0
        %1731 = vmatpush1.msra.mxu0 %v1727
        %1732 = vmatprep.subr.mxu0 0.0
        %1733 = vmatpush1.msra.mxu0 0.0
        %1734 = vmatprep.subr.mxu0 0.0
        %1735 = vmatpush1.msra.mxu0 0.0
        %1736 = vmatprep.subr.mxu0 0.0
        %1737 = vmatpush1.msra.mxu0 0.0
        %1738 = vmatprep.subr.mxu0 0.0
        %1739 = vmatpush1.msra.mxu0 0.0
        %1740 = vmatprep.subr.mxu0 0.0
        %1741 = vmatpush1.msra.mxu0 0.0
        %1742 = vmatprep.subr.mxu0 0.0
        %1743 = vmatpush1.msra.mxu0 0.0
        %1744 = vmatprep.subr.mxu0 0.0
        %1745 = vmatpush1.msra.mxu0 0.0
        %1746 = vmatprep.subr.mxu0 0.0
        %1747 = vmatpush1.msra.mxu0 0.0
        %1748 = vmatprep.subr.mxu0 0.0
        %1749 = vmatpush1.msra.mxu0 0.0
        %1750 = vmatprep.subr.mxu0 0.0
        %1751 = vmatpush1.msra.mxu0 0.0
        %1752 = vmatprep.subr.mxu0 0.0
        %1753 = vmatpush1.msra.mxu0 0.0
        %1754 = vmatprep.subr.mxu0 0.0
        %1755 = vmatpush1.msra.mxu0 0.0
        %1756 = vmatprep.subr.mxu0 0.0
        %1757 = vmatpush1.msra.mxu0 0.0
        %1758 = vmatprep.subr.mxu0 0.0
        %1759 = vmatpush1.msra.mxu0 0.0
        %1760 = vmatprep.subr.mxu0 0.0
        %1761 = vmatpush1.msra.mxu0 0.0
        %1762 = vmatprep.subr.mxu0 0.0
        %1763 = vmatpush1.msra.mxu0 0.0
        %1764 = vmatprep.subr.mxu0 0.0
        %1765 = vmatpush1.msra.mxu0 0.0
        %1766 = vmatprep.subr.mxu0 0.0
        %1767 = vmatpush1.msra.mxu0 0.0
        %1768 = vmatprep.subr.mxu0 0.0
        %1769 = vmatpush1.msra.mxu0 0.0
        %1770 = vmatprep.subr.mxu0 0.0
        %1771 = vmatpush1.msra.mxu0 0.0
        %1772 = vmatprep.subr.mxu0 0.0
        %1773 = vmatpush1.msra.mxu0 0.0
        %1774 = vmatprep.subr.mxu0 0.0
        %1775 = vmatpush1.msra.mxu0 0.0
        %1776 = vmatprep.subr.mxu0 0.0
        %1777 = vmatpush1.msra.mxu0 0.0
        %1778 = vmatprep.subr.mxu0 0.0
        %1779 = vmatpush1.msra.mxu0 0.0
        %1780 = vmatprep.subr.mxu0 0.0
        %1781 = vmatpush1.msra.mxu0 0.0
        %1782 = vmatprep.subr.mxu0 0.0
        %1783 = vmatpush1.msra.mxu0 0.0
        %1784 = vmatprep.subr.mxu0 0.0
        %1785 = vmatpush1.msra.mxu0 0.0
        %1786 = vmatprep.subr.mxu0 0.0
        %1787 = vmatpush1.msra.mxu0 0.0
        %1788 = vmatprep.subr.mxu0 0.0
        %1789 = vmatpush1.msra.mxu0 0.0
        %1790 = vmatprep.subr.mxu0 0.0
        %1791 = vmatpush1.msra.mxu0 0.0
        %1792 = vmatprep.mubr.f32.mxu0 0.0
        %1793 = vmatmul.mubr.f32.gmra.mrb[0].mxu0 %v392
        %v1794 = vpop.f32.mrb[0].mxu0
        %v1795 = vadd.f32 0.0, %v1794
        %v1796 = vpop.f32.mrb[0].mxu0
        %1797 = vdwg.mxu0
        %v1799 = vsel %vm390, %v1795, 0
        %1801 = vmatprep.subr.mxu0 0.0
        %1802 = vmatpush1.msra.mxu0 %v382
        %1803 = vmatprep.subr.mxu0 0.0
        %1804 = vmatpush1.msra.mxu0 %v383
        %1805 = vmatprep.subr.mxu0 0.0
        %1806 = vmatpush1.msra.mxu0 0.0
        %1807 = vmatprep.subr.mxu0 0.0
        %1808 = vmatpush1.msra.mxu0 0.0
        %1809 = vmatprep.subr.mxu0 0.0
        %1810 = vmatpush1.msra.mxu0 0.0
        %1811 = vmatprep.subr.mxu0 0.0
        %1812 = vmatpush1.msra.mxu0 0.0
        %1813 = vmatprep.subr.mxu0 0.0
        %1814 = vmatpush1.msra.mxu0 0.0
        %1815 = vmatprep.subr.mxu0 0.0
        %1816 = vmatpush1.msra.mxu0 0.0
        %1817 = vmatprep.subr.mxu0 0.0
        %1818 = vmatpush1.msra.mxu0 0.0
        %1819 = vmatprep.subr.mxu0 0.0
        %1820 = vmatpush1.msra.mxu0 0.0
        %1821 = vmatprep.subr.mxu0 0.0
        %1822 = vmatpush1.msra.mxu0 0.0
        %1823 = vmatprep.subr.mxu0 0.0
        %1824 = vmatpush1.msra.mxu0 0.0
        %1825 = vmatprep.subr.mxu0 0.0
        %1826 = vmatpush1.msra.mxu0 0.0
        %1827 = vmatprep.subr.mxu0 0.0
        %1828 = vmatpush1.msra.mxu0 0.0
        %1829 = vmatprep.subr.mxu0 0.0
        %1830 = vmatpush1.msra.mxu0 0.0
        %1831 = vmatprep.subr.mxu0 0.0
        %1832 = vmatpush1.msra.mxu0 0.0
        %1833 = vmatprep.subr.mxu0 0.0
        %1834 = vmatpush1.msra.mxu0 0.0
        %1835 = vmatprep.subr.mxu0 0.0
        %1836 = vmatpush1.msra.mxu0 0.0
        %1837 = vmatprep.subr.mxu0 0.0
        %1838 = vmatpush1.msra.mxu0 0.0
        %1839 = vmatprep.subr.mxu0 0.0
        %1840 = vmatpush1.msra.mxu0 0.0
        %1841 = vmatprep.subr.mxu0 0.0
        %1842 = vmatpush1.msra.mxu0 0.0
        %1843 = vmatprep.subr.mxu0 0.0
        %1844 = vmatpush1.msra.mxu0 0.0
        %1845 = vmatprep.subr.mxu0 0.0
        %1846 = vmatpush1.msra.mxu0 0.0
        %1847 = vmatprep.subr.mxu0 0.0
        %1848 = vmatpush1.msra.mxu0 0.0
        %1849 = vmatprep.subr.mxu0 0.0
        %1850 = vmatpush1.msra.mxu0 0.0
        %1851 = vmatprep.subr.mxu0 0.0
        %1852 = vmatpush1.msra.mxu0 0.0
        %1853 = vmatprep.subr.mxu0 0.0
        %1854 = vmatpush1.msra.mxu0 0.0
        %1855 = vmatprep.subr.mxu0 0.0
        %1856 = vmatpush1.msra.mxu0 0.0
        %1857 = vmatprep.subr.mxu0 0.0
        %1858 = vmatpush1.msra.mxu0 0.0
        %1859 = vmatprep.subr.mxu0 0.0
        %1860 = vmatpush1.msra.mxu0 0.0
        %1861 = vmatprep.subr.mxu0 0.0
        %1862 = vmatpush1.msra.mxu0 0.0
        %1863 = vmatprep.subr.mxu0 0.0
        %1864 = vmatpush1.msra.mxu0 0.0
        %1865 = vmatprep.mubr.f32.mxu0 0.0
        %1866 = vmatmul.mubr.f32.gmra.mrb[0].mxu0 %v1799
        %v1867 = vpop.f32.mrb[0].mxu0
        %v1868 = vadd.f32 0.0, %v1867
        %v1869 = vpop.f32.mrb[0].mxu0
        %1870 = vdwg.mxu0
        %1871 = vmatprep.subr.mxu0 0.0
        %1872 = vmatpush1.msra.mxu0 %v1868
        %1873 = vmatprep.subr.mxu0 0.0
        %1874 = vmatpush1.msra.mxu0 0.0
        %1875 = vmatprep.subr.mxu0 0.0
        %1876 = vmatpush1.msra.mxu0 0.0
        %1877 = vmatprep.subr.mxu0 0.0
        %1878 = vmatpush1.msra.mxu0 0.0
        %1879 = vmatprep.subr.mxu0 0.0
        %1880 = vmatpush1.msra.mxu0 0.0
        %1881 = vmatprep.subr.mxu0 0.0
        %1882 = vmatpush1.msra.mxu0 0.0
        %1883 = vmatprep.subr.mxu0 0.0
        %1884 = vmatpush1.msra.mxu0 0.0
        %1885 = vmatprep.subr.mxu0 0.0
        %1886 = vmatpush1.msra.mxu0 0.0
        %1887 = vmatprep.subr.mxu0 0.0
        %1888 = vmatpush1.msra.mxu0 0.0
        %1889 = vmatprep.subr.mxu0 0.0
        %1890 = vmatpush1.msra.mxu0 0.0
        %1891 = vmatprep.subr.mxu0 0.0
        %1892 = vmatpush1.msra.mxu0 0.0
        %1893 = vmatprep.subr.mxu0 0.0
        %1894 = vmatpush1.msra.mxu0 0.0
        %1895 = vmatprep.subr.mxu0 0.0
        %1896 = vmatpush1.msra.mxu0 0.0
        %1897 = vmatprep.subr.mxu0 0.0
        %1898 = vmatpush1.msra.mxu0 0.0
        %1899 = vmatprep.subr.mxu0 0.0
        %1900 = vmatpush1.msra.mxu0 0.0
        %1901 = vmatprep.subr.mxu0 0.0
        %1902 = vmatpush1.msra.mxu0 0.0
        %1903 = vmatprep.subr.mxu0 0.0
        %1904 = vmatpush1.msra.mxu0 0.0
        %1905 = vmatprep.subr.mxu0 0.0
        %1906 = vmatpush1.msra.mxu0 0.0
        %1907 = vmatprep.subr.mxu0 0.0
        %1908 = vmatpush1.msra.mxu0 0.0
        %1909 = vmatprep.subr.mxu0 0.0
        %1910 = vmatpush1.msra.mxu0 0.0
        %1911 = vmatprep.subr.mxu0 0.0
        %1912 = vmatpush1.msra.mxu0 0.0
        %1913 = vmatprep.subr.mxu0 0.0
        %1914 = vmatpush1.msra.mxu0 0.0
        %1915 = vmatprep.subr.mxu0 0.0
        %1916 = vmatpush1.msra.mxu0 0.0
        %1917 = vmatprep.subr.mxu0 0.0
        %1918 = vmatpush1.msra.mxu0 0.0
        %1919 = vmatprep.subr.mxu0 0.0
        %1920 = vmatpush1.msra.mxu0 0.0
        %1921 = vmatprep.subr.mxu0 0.0
        %1922 = vmatpush1.msra.mxu0 0.0
        %1923 = vmatprep.subr.mxu0 0.0
        %1924 = vmatpush1.msra.mxu0 0.0
        %1925 = vmatprep.subr.mxu0 0.0
        %1926 = vmatpush1.msra.mxu0 0.0
        %1927 = vmatprep.subr.mxu0 0.0
        %1928 = vmatpush1.msra.mxu0 0.0
        %1929 = vmatprep.subr.mxu0 0.0
        %1930 = vmatpush1.msra.mxu0 0.0
        %1931 = vmatprep.subr.mxu0 0.0
        %1932 = vmatpush1.msra.mxu0 0.0
        %1933 = vmatprep.subr.mxu0 0.0
        %1934 = vmatpush1.msra.mxu0 0.0
        %1935 = vmatprep.mubr.f32.mxu0 0.0
        %1936 = vmatmul.mubr.f32.gmra.mrb[0].mxu0 %v539
        %v1937 = vpop.f32.mrb[0].mxu0
        %v1938 = vadd.f32 0.0, %v1937
        %v1939 = vpop.f32.mrb[0].mxu0
        %1940 = vdwg.mxu0
        %v1942 = vsel %vm537, %v1938, 0
        %1944 = vmatprep.subr.mxu0 0.0
        %1945 = vmatpush1.msra.mxu0 %v385
        %1946 = vmatprep.subr.mxu0 0.0
        %1947 = vmatpush1.msra.mxu0 0.0
        %1948 = vmatprep.subr.mxu0 0.0
        %1949 = vmatpush1.msra.mxu0 0.0
        %1950 = vmatprep.subr.mxu0 0.0
        %1951 = vmatpush1.msra.mxu0 0.0
        %1952 = vmatprep.subr.mxu0 0.0
        %1953 = vmatpush1.msra.mxu0 0.0
        %1954 = vmatprep.subr.mxu0 0.0
        %1955 = vmatpush1.msra.mxu0 0.0
        %1956 = vmatprep.subr.mxu0 0.0
        %1957 = vmatpush1.msra.mxu0 0.0
        %1958 = vmatprep.subr.mxu0 0.0
        %1959 = vmatpush1.msra.mxu0 0.0
        %1960 = vmatprep.subr.mxu0 0.0
        %1961 = vmatpush1.msra.mxu0 0.0
        %1962 = vmatprep.subr.mxu0 0.0
        %1963 = vmatpush1.msra.mxu0 0.0
        %1964 = vmatprep.subr.mxu0 0.0
        %1965 = vmatpush1.msra.mxu0 0.0
        %1966 = vmatprep.subr.mxu0 0.0
        %1967 = vmatpush1.msra.mxu0 0.0
        %1968 = vmatprep.subr.mxu0 0.0
        %1969 = vmatpush1.msra.mxu0 0.0
        %1970 = vmatprep.subr.mxu0 0.0
        %1971 = vmatpush1.msra.mxu0 0.0
        %1972 = vmatprep.subr.mxu0 0.0
        %1973 = vmatpush1.msra.mxu0 0.0
        %1974 = vmatprep.subr.mxu0 0.0
        %1975 = vmatpush1.msra.mxu0 0.0
        %1976 = vmatprep.subr.mxu0 0.0
        %1977 = vmatpush1.msra.mxu0 0.0
        %1978 = vmatprep.subr.mxu0 0.0
        %1979 = vmatpush1.msra.mxu0 0.0
        %1980 = vmatprep.subr.mxu0 0.0
        %1981 = vmatpush1.msra.mxu0 0.0
        %1982 = vmatprep.subr.mxu0 0.0
        %1983 = vmatpush1.msra.mxu0 0.0
        %1984 = vmatprep.subr.mxu0 0.0
        %1985 = vmatpush1.msra.mxu0 0.0
        %1986 = vmatprep.subr.mxu0 0.0
        %1987 = vmatpush1.msra.mxu0 0.0
        %1988 = vmatprep.subr.mxu0 0.0
        %1989 = vmatpush1.msra.mxu0 0.0
        %1990 = vmatprep.subr.mxu0 0.0
        %1991 = vmatpush1.msra.mxu0 0.0
        %1992 = vmatprep.subr.mxu0 0.0
        %1993 = vmatpush1.msra.mxu0 0.0
        %1994 = vmatprep.subr.mxu0 0.0
        %1995 = vmatpush1.msra.mxu0 0.0
        %1996 = vmatprep.subr.mxu0 0.0
        %1997 = vmatpush1.msra.mxu0 0.0
        %1998 = vmatprep.subr.mxu0 0.0
        %1999 = vmatpush1.msra.mxu0 0.0
        %2000 = vmatprep.subr.mxu0 0.0
        %2001 = vmatpush1.msra.mxu0 0.0
        %2002 = vmatprep.subr.mxu0 0.0
        %2003 = vmatpush1.msra.mxu0 0.0
        %2004 = vmatprep.subr.mxu0 0.0
        %2005 = vmatpush1.msra.mxu0 0.0
        %2006 = vmatprep.subr.mxu0 0.0
        %2007 = vmatpush1.msra.mxu0 0.0
        %2008 = vmatprep.mubr.f32.mxu0 0.0
        %2009 = vmatmul.mubr.f32.gmra.mrb[0].mxu0 %v1942
        %v2010 = vpop.f32.mrb[0].mxu0
        %v2011 = vadd.f32 0.0, %v2010
        %v2012 = vpop.f32.mrb[0].mxu0
        %2013 = vdwg.mxu0
        %v2015 = vsel %vm688, %v2011, 0
        %2017 = vmatprep.subr.mxu0 0.0
        %2018 = vmatpush1.msra.mxu0 %v2015
        %2019 = vmatprep.subr.mxu0 0.0
        %2020 = vmatpush1.msra.mxu0 0.0
        %2021 = vmatprep.subr.mxu0 0.0
        %2022 = vmatpush1.msra.mxu0 0.0
        %2023 = vmatprep.subr.mxu0 0.0
        %2024 = vmatpush1.msra.mxu0 0.0
        %2025 = vmatprep.subr.mxu0 0.0
        %2026 = vmatpush1.msra.mxu0 0.0
        %2027 = vmatprep.subr.mxu0 0.0
        %2028 = vmatpush1.msra.mxu0 0.0
        %2029 = vmatprep.subr.mxu0 0.0
        %2030 = vmatpush1.msra.mxu0 0.0
        %2031 = vmatprep.subr.mxu0 0.0
        %2032 = vmatpush1.msra.mxu0 0.0
        %2033 = vmatprep.subr.mxu0 0.0
        %2034 = vmatpush1.msra.mxu0 0.0
        %2035 = vmatprep.subr.mxu0 0.0
        %2036 = vmatpush1.msra.mxu0 0.0
        %2037 = vmatprep.subr.mxu0 0.0
        %2038 = vmatpush1.msra.mxu0 0.0
        %2039 = vmatprep.subr.mxu0 0.0
        %2040 = vmatpush1.msra.mxu0 0.0
        %2041 = vmatprep.subr.mxu0 0.0
        %2042 = vmatpush1.msra.mxu0 0.0
        %2043 = vmatprep.subr.mxu0 0.0
        %2044 = vmatpush1.msra.mxu0 0.0
        %2045 = vmatprep.subr.mxu0 0.0
        %2046 = vmatpush1.msra.mxu0 0.0
        %2047 = vmatprep.subr.mxu0 0.0
        %2048 = vmatpush1.msra.mxu0 0.0
        %2049 = vmatprep.subr.mxu0 0.0
        %2050 = vmatpush1.msra.mxu0 0.0
        %2051 = vmatprep.subr.mxu0 0.0
        %2052 = vmatpush1.msra.mxu0 0.0
        %2053 = vmatprep.subr.mxu0 0.0
        %2054 = vmatpush1.msra.mxu0 0.0
        %2055 = vmatprep.subr.mxu0 0.0
        %2056 = vmatpush1.msra.mxu0 0.0
        %2057 = vmatprep.subr.mxu0 0.0
        %2058 = vmatpush1.msra.mxu0 0.0
        %2059 = vmatprep.subr.mxu0 0.0
        %2060 = vmatpush1.msra.mxu0 0.0
        %2061 = vmatprep.subr.mxu0 0.0
        %2062 = vmatpush1.msra.mxu0 0.0
        %2063 = vmatprep.subr.mxu0 0.0
        %2064 = vmatpush1.msra.mxu0 0.0
        %2065 = vmatprep.subr.mxu0 0.0
        %2066 = vmatpush1.msra.mxu0 0.0
        %2067 = vmatprep.subr.mxu0 0.0
        %2068 = vmatpush1.msra.mxu0 0.0
        %2069 = vmatprep.subr.mxu0 0.0
        %2070 = vmatpush1.msra.mxu0 0.0
        %2071 = vmatprep.subr.mxu0 0.0
        %2072 = vmatpush1.msra.mxu0 0.0
        %2073 = vmatprep.subr.mxu0 0.0
        %2074 = vmatpush1.msra.mxu0 0.0
        %2075 = vmatprep.subr.mxu0 0.0
        %2076 = vmatpush1.msra.mxu0 0.0
        %2077 = vmatprep.subr.mxu0 0.0
        %2078 = vmatpush1.msra.mxu0 0.0
        %2079 = vmatprep.subr.mxu0 0.0
        %2080 = vmatpush1.msra.mxu0 0.0
        %2081 = vmatprep.mubr.f32.mxu0 0.0
        %2082 = vmatmul.mubr.f32.gmra.mrb[0].mxu0 %v686
        %v2083 = vpop.f32.mrb[0].mxu0
        %v2084 = vadd.f32 0.0, %v2083
        %v2085 = vpop.f32.mrb[0].mxu0
        %2086 = vdwg.mxu0
        %v2088 = vsel %vm684, %v2084, 0
        %2090 = vmatprep.subr.mxu0 0.0
        %2091 = vmatpush1.msra.mxu0 %v766
        %2092 = vmatprep.subr.mxu0 0.0
        %2093 = vmatpush1.msra.mxu0 0.0
        %2094 = vmatprep.subr.mxu0 0.0
        %2095 = vmatpush1.msra.mxu0 0.0
        %2096 = vmatprep.subr.mxu0 0.0
        %2097 = vmatpush1.msra.mxu0 0.0
        %2098 = vmatprep.subr.mxu0 0.0
        %2099 = vmatpush1.msra.mxu0 0.0
        %2100 = vmatprep.subr.mxu0 0.0
        %2101 = vmatpush1.msra.mxu0 0.0
        %2102 = vmatprep.subr.mxu0 0.0
        %2103 = vmatpush1.msra.mxu0 0.0
        %2104 = vmatprep.subr.mxu0 0.0
        %2105 = vmatpush1.msra.mxu0 0.0
        %2106 = vmatprep.subr.mxu0 0.0
        %2107 = vmatpush1.msra.mxu0 0.0
        %2108 = vmatprep.subr.mxu0 0.0
        %2109 = vmatpush1.msra.mxu0 0.0
        %2110 = vmatprep.subr.mxu0 0.0
        %2111 = vmatpush1.msra.mxu0 0.0
        %2112 = vmatprep.subr.mxu0 0.0
        %2113 = vmatpush1.msra.mxu0 0.0
        %2114 = vmatprep.subr.mxu0 0.0
        %2115 = vmatpush1.msra.mxu0 0.0
        %2116 = vmatprep.subr.mxu0 0.0
        %2117 = vmatpush1.msra.mxu0 0.0
        %2118 = vmatprep.subr.mxu0 0.0
        %2119 = vmatpush1.msra.mxu0 0.0
        %2120 = vmatprep.subr.mxu0 0.0
        %2121 = vmatpush1.msra.mxu0 0.0
        %2122 = vmatprep.subr.mxu0 0.0
        %2123 = vmatpush1.msra.mxu0 0.0
        %2124 = vmatprep.subr.mxu0 0.0
        %2125 = vmatpush1.msra.mxu0 0.0
        %2126 = vmatprep.subr.mxu0 0.0
        %2127 = vmatpush1.msra.mxu0 0.0
        %2128 = vmatprep.subr.mxu0 0.0
        %2129 = vmatpush1.msra.mxu0 0.0
        %2130 = vmatprep.subr.mxu0 0.0
        %2131 = vmatpush1.msra.mxu0 0.0
        %2132 = vmatprep.subr.mxu0 0.0
        %2133 = vmatpush1.msra.mxu0 0.0
        %2134 = vmatprep.subr.mxu0 0.0
        %2135 = vmatpush1.msra.mxu0 0.0
        %2136 = vmatprep.subr.mxu0 0.0
        %2137 = vmatpush1.msra.mxu0 0.0
        %2138 = vmatprep.subr.mxu0 0.0
        %2139 = vmatpush1.msra.mxu0 0.0
        %2140 = vmatprep.subr.mxu0 0.0
        %2141 = vmatpush1.msra.mxu0 0.0
        %2142 = vmatprep.subr.mxu0 0.0
        %2143 = vmatpush1.msra.mxu0 0.0
        %2144 = vmatprep.subr.mxu0 0.0
        %2145 = vmatpush1.msra.mxu0 0.0
        %2146 = vmatprep.subr.mxu0 0.0
        %2147 = vmatpush1.msra.mxu0 0.0
        %2148 = vmatprep.subr.mxu0 0.0
        %2149 = vmatpush1.msra.mxu0 0.0
        %2150 = vmatprep.subr.mxu0 0.0
        %2151 = vmatpush1.msra.mxu0 0.0
        %2152 = vmatprep.subr.mxu0 0.0
        %2153 = vmatpush1.msra.mxu0 0.0
        %2154 = vmatprep.mubr.f32.mxu0 0.0
        %2155 = vmatmul.mubr.f32.gmra.mrb[0].mxu0 %v2088
        %v2156 = vpop.f32.mrb[0].mxu0
        %v2157 = vadd.f32 0.0, %v2156
        %v2158 = vpop.f32.mrb[0].mxu0
        %2159 = vdwg.mxu0
        %s2160 = scalar_lea.vmem %s352, 24 [#allocation5]
        %2161 = vst.msk [vmem:[%s2160] sm:$0xff] %vm537, %v1868
        %s2162 = scalar_lea.vmem %s373, 12
        %2163 = vst.msk [vmem:[%s2162] sm:$0xf] %vm839, %v2011
        %s2164 = scalar_lea.vmem %s379, 6
        %2165 = vst.msk [vmem:[%s2164] sm:$0x3] %vm841, %v2157
        %s2166 = sand.u32 %s187, 1
        %s2167 = scalar_lea.sflag [#allocation4], %s2166
        %s2168 = sand.u32 %s187, 1
        %s2169 = smul.addr %s2168, 32
        %s2170 = scalar_lea.vmem [#allocation5], %s2169
        %s2171 = smul.u32 4, %s27
        %p2172 = scmp.lt.s32.totalorder %s2171, 7
        %s2173 = scalar_select %p2172, %s2171, 7
        %s2174 = smul.addr %s2173, 4
        %s2175 = scalar_lea.vmem %s8, %s2174
        %s2176 = smul.u32 4, %s27
        %p2177 = scmp.lt.s32.totalorder %s2176, 7
        %s2178 = scalar_select %p2177, %s2176, 7
        %s2179 = smul.addr %s2178, 2
        %s2180 = scalar_lea.vmem %s9, %s2179
        // Predicated region
        $region53: #{tpu_custom_call.1} parent=47 // pred_check
          %p2181 = pneg %p197
        $region54: #{tpu_custom_call.1} parent=47 // pred_check_branch
          %2183 = sbr.rel (%p2181) target = $region56
        $region55: #{tpu_custom_call.1} parent=47 // pred_region
          %s2184 = smul.u32 4, %s27
          %s2186 = ssub.s32 512, 512
          %2187 = vsyncadd %s2167, %s2186
          %s2188 = smul.addr %s2184, 128
          %s2189 = scalar_lea.hbm %s7, %s2188
          %s2190 = sshll.u32 %s2170, 4
          %s2191 = int_to_ptr.vmem [resolvable:$true] %s2190
          %2196 = dma.vmem_to_hbm [thread:$0]  %s2191, 512, %s2189, %s2167, 128, 128, 8
        $region56: #{tpu_custom_call.1} parent=47 // pred_fallthru
          _
        // Predicated region
        $region57: #{tpu_custom_call.1} parent=47 // pred_check
          %p2197 = pneg %p223
        $region58: #{tpu_custom_call.1} parent=47 // pred_check_branch
          %2199 = sbr.rel (%p2197) target = $region60
        $region59: #{tpu_custom_call.1} parent=47 // pred_region
          %s2200 = smul.u32 4, %s27
        $region60: #{tpu_custom_call.1} parent=47 // pred_fallthru
          _
        // Predicated region
        $region61: #{tpu_custom_call.1} parent=47 // pred_check
          %p2201 = pneg %p249
        $region62: #{tpu_custom_call.1} parent=47 // pred_check_branch
          %2203 = sbr.rel (%p2201) target = $region64
        $region63: #{tpu_custom_call.1} parent=47 // pred_region
          %s2204 = smul.u32 4, %s27
        $region64: #{tpu_custom_call.1} parent=47 // pred_fallthru
          _
      $region48: #{tpu_custom_call.1} parent=5 // pred_fallthru
        _
      %p2205 = scmp.le.s32.totalorder 2, %s22
      // Predicated region
      $region65: #{tpu_custom_call.1} parent=5 // pred_check
        %p2206 = pneg %p2205
      $region66: #{tpu_custom_call.1} parent=5 // pred_check_branch
        %2208 = sbr.rel (%p2206) target = $region68
      $region67: #{tpu_custom_call.1} parent=5 // pred_region
        %s2209 = ssub.s32 %s22, 2
        // Predicated region
        $region69: #{tpu_custom_call.1} parent=67 // pred_check
          %p2210 = pneg %p203
        $region70: #{tpu_custom_call.1} parent=67 // pred_check_branch
          %2212 = sbr.rel (%p2210) target = $region72
        $region71: #{tpu_custom_call.1} parent=67 // pred_region
          %s2213 = sand.u32 %s188, 1
          %s2214 = scalar_lea.sflag [#allocation4], %s2213
          %s2215 = sand.u32 %s188, 1
          %s2216 = smul.addr %s2215, 32
          %s2217 = scalar_lea.vmem [#allocation5], %s2216
          %2218 = dma.done %s2214, 512
        $region72: #{tpu_custom_call.1} parent=67 // pred_fallthru
          _
        // Predicated region
        $region73: #{tpu_custom_call.1} parent=67 // pred_check
          %p2219 = pneg %p229
        $region74: #{tpu_custom_call.1} parent=67 // pred_check_branch
          %2221 = sbr.rel (%p2219) target = $region76
        $region75: #{tpu_custom_call.1} parent=67 // pred_region
          %s2222 = smul.u32 4, %s28
          %p2223 = scmp.lt.s32.totalorder %s2222, 7
          %s2224 = scalar_select %p2223, %s2222, 7
          %s2225 = smul.addr %s2224, 4
          %s2226 = scalar_lea.vmem %s8, %s2225
        $region76: #{tpu_custom_call.1} parent=67 // pred_fallthru
          _
        // Predicated region
        $region77: #{tpu_custom_call.1} parent=67 // pred_check
          %p2227 = pneg %p255
        $region78: #{tpu_custom_call.1} parent=67 // pred_check_branch
          %2229 = sbr.rel (%p2227) target = $region80
        $region79: #{tpu_custom_call.1} parent=67 // pred_region
          %s2230 = smul.u32 4, %s28
          %p2231 = scmp.lt.s32.totalorder %s2230, 7
          %s2232 = scalar_select %p2231, %s2230, 7
          %s2233 = smul.addr %s2232, 2
          %s2234 = scalar_lea.vmem %s9, %s2233
        $region80: #{tpu_custom_call.1} parent=67 // pred_fallthru
          _
      $region68: #{tpu_custom_call.1} parent=5 // pred_fallthru
        _
    $region6: #{tpu_custom_call.1} parent=1 // loop_footer
      %s26 = sadd.s32 1, %s22
    $region7: #{tpu_custom_call.1} parent=1 // loop_footer_branch
      %21 = sbr.rel target = $region3
    $region8: #{tpu_custom_call.1} parent=1 // loop_exit
      _
    %2235 = vsyncpa [#allocation3], 1
    %s2236 = scalar_lea.sflag [#allocation3], 1
    %2237 = vsyncpa %s2236, 1
    %2238 = vsyncpa [#allocation4], 1
    %s2239 = scalar_lea.sflag [#allocation4], 1
    %2240 = vsyncpa %s2239, 1

</llo_original>
